<compile_context>
chip_gen: v7x
topology: tpu7x:2x2x1
jax: 0.10.0
libtpu: 0.0.40
codegen_flags: <defaults>
</compile_context>

<pallas_src>
import functools

import jax
import jax.numpy as jnp
from jax import lax
from jax.experimental import pallas as pl
from jax.experimental.pallas import tpu as pltpu


BLOCK_SIZE = 50      # max sequence length (from Train.py)
N_EMBD = 512         # embedding width (from Train.py)


def mha_kernel(x_ref, wq_ref, wk_ref, wv_ref, relg_ref, wp_ref, bp_ref,
               o_ref, acc_ref, *, scale):
    h = pl.program_id(1)
    num_heads = pl.num_programs(1)

    @pl.when(h == 0)
    def _init():
        acc_ref[...] = jnp.zeros_like(acc_ref)

    cd = x_ref.dtype                       # compute dtype (bf16 or f32)
    x = x_ref[0]                           # (T, C), already in compute dtype

    # Per-head projections (bias=False), f32 accumulation on the MXU.
    q = jnp.dot(x, wq_ref[0], preferred_element_type=jnp.float32)   # (T, D)
    k = jnp.dot(x, wk_ref[0], preferred_element_type=jnp.float32)   # (T, D)
    v = jnp.dot(x, wv_ref[0], preferred_element_type=jnp.float32)   # (T, D)

    # Content scores: (q @ k^T) * head_size**-0.5 (contract on D, no copy of k^T).
    scores = lax.dot_general(
        q.astype(cd), k.astype(cd), (((1,), (1,)), ((), ())),
        preferred_element_type=jnp.float32) * scale                  # (T, T)

    # Relative-position bias: sum_d q[t, d] * relg[t, s, d]  (VPU work, f32).
    rel = relg_ref[0].astype(jnp.float32)                            # (T, T, D)
    scores = scores + jnp.sum(q[:, None, :] * rel, axis=-1)          # (T, T)

    # Causal mask + softmax in f32.
    t = scores.shape[0]
    row = lax.broadcasted_iota(jnp.int32, (t, t), 0)
    col = lax.broadcasted_iota(jnp.int32, (t, t), 1)
    scores = jnp.where(col <= row, scores, -1e30)
    m = jnp.max(scores, axis=-1, keepdims=True)
    p = jnp.exp(scores - m)
    attn = p / jnp.sum(p, axis=-1, keepdims=True)
    # (Dropout on attn is identity in eval mode.)

    out_h = jnp.dot(attn.astype(cd), v.astype(cd),
                    preferred_element_type=jnp.float32)              # (T, D)

    # Fold this head into the output projection: concat-then-matmul is the sum
    # over heads of (T, D) @ Wp[h*D:(h+1)*D, :].
    acc_ref[...] += jnp.dot(out_h.astype(cd), wp_ref[0],
                            preferred_element_type=jnp.float32)      # (T, C)

    @pl.when(h == num_heads - 1)
    def _finalize():
        # proj bias added once in f32; output dropout is identity (eval mode).
        o_ref[0] = (acc_ref[...] + bp_ref[...]).astype(o_ref.dtype)


def multihead_attention_pallas(x, params, *, compute_dtype=jnp.bfloat16,
                               block_size=BLOCK_SIZE,
                               vmem_limit_bytes=48 * 1024 * 1024):
    """x: (B, T, n_embd) with T <= block_size. Returns (B, T, n_embd), x.dtype."""
    wq, wk, wv, rel_tables, wp, bp = params
    B, T, C = x.shape
    H, _, D = wq.shape
    scale = float(D) ** -0.5

    # Relative-position gather (pure data prep, outside the kernel):
    #   relg[h, t, s, :] = rel_tables[h, clamp(s - t) + block_size - 1, :]
    rel_idx = jnp.arange(T)[None, :] - jnp.arange(T)[:, None]
    rel_idx = jnp.clip(rel_idx, -(block_size - 1), block_size - 1) + block_size - 1
    relg = rel_tables[:, rel_idx, :]                                 # (H, T, T, D)

    cd = compute_dtype
    out = pl.pallas_call(
        functools.partial(mha_kernel, scale=scale),
        out_shape=jax.ShapeDtypeStruct((B, T, C), x.dtype),
        grid=(B, H),
        in_specs=[
            pl.BlockSpec((1, T, C), lambda b, h: (b, 0, 0)),         # x
            pl.BlockSpec((1, C, D), lambda b, h: (h, 0, 0)),         # Wq (per head)
            pl.BlockSpec((1, C, D), lambda b, h: (h, 0, 0)),         # Wk (per head)
            pl.BlockSpec((1, C, D), lambda b, h: (h, 0, 0)),         # Wv (per head)
            pl.BlockSpec((1, T, T, D), lambda b, h: (h, 0, 0, 0)),   # gathered rel table
            pl.BlockSpec((1, D, C), lambda b, h: (h, 0, 0)),         # Wp row-slice
            pl.BlockSpec((1, C), lambda b, h: (0, 0)),               # proj bias (f32)
        ],
        out_specs=pl.BlockSpec((1, T, C), lambda b, h: (b, 0, 0)),
        scratch_shapes=[pltpu.VMEM((T, C), jnp.float32)],
        compiler_params=pltpu.CompilerParams(
            dimension_semantics=("parallel", "arbitrary"),
            vmem_limit_bytes=vmem_limit_bytes),
    )(x.astype(cd), wq.astype(cd), wk.astype(cd), wv.astype(cd),
      relg.astype(cd), wp.astype(cd), bp.astype(jnp.float32))
    return out


def init_params(key, n_embd, num_heads, head_size, block_size):
    """PyTorch-style init. Linear weights stored as (in, out); per-head layout:
    wq/wk/wv: (H, n_embd, head_size), rel tables: (H, 2*block_size-1, head_size),
    wp: (H, head_size, n_embd) == reshape of the (H*head_size, n_embd) proj weight."""
    keys = jax.random.split(key, 6)

    def lin_w(k, fan_in, shape):
        bound = 1.0 / (fan_in ** 0.5)
        return jax.random.uniform(k, shape, jnp.float32, -bound, bound)

    wq = lin_w(keys[0], n_embd, (num_heads, n_embd, head_size))
    wk = lin_w(keys[1], n_embd, (num_heads, n_embd, head_size))
    wv = lin_w(keys[2], n_embd, (num_heads, n_embd, head_size))
    rel_tables = jax.random.normal(
        keys[3], (num_heads, 2 * block_size - 1, head_size), jnp.float32)
    wp = lin_w(keys[4], num_heads * head_size, (num_heads, head_size, n_embd))
    bound = 1.0 / ((num_heads * head_size) ** 0.5)
    bp = jax.random.uniform(keys[5], (1, n_embd), jnp.float32, -bound, bound)
    return (wq, wk, wv, rel_tables, wp, bp)


def multihead_attention_ref(x, params, *, block_size=BLOCK_SIZE):
    """Pure-JAX f32 reference mirroring the PyTorch module (eval mode)."""
    wq, wk, wv, rel_tables, wp, bp = params
    B, T, C = x.shape
    H, _, D = wq.shape
    hp = jax.lax.Precision.HIGHEST
    q = jnp.einsum('btc,hcd->bhtd', x, wq, precision=hp)
    k = jnp.einsum('btc,hcd->bhtd', x, wk, precision=hp)
    v = jnp.einsum('btc,hcd->bhtd', x, wv, precision=hp)
    rel_idx = jnp.arange(T)[None, :] - jnp.arange(T)[:, None]
    rel_idx = jnp.clip(rel_idx, -(block_size - 1), block_size - 1) + block_size - 1
    relg = rel_tables[:, rel_idx, :]                                 # (H, T, T, D)
    wei = jnp.einsum('bhtd,bhsd->bhts', q, k, precision=hp) * (float(D) ** -0.5)
    wei = wei + jnp.einsum('bhtd,htsd->bhts', q, relg, precision=hp)
    mask = jnp.tril(jnp.ones((T, T), dtype=bool))
    wei = jnp.where(mask[None, None], wei, -jnp.inf)
    attn = jax.nn.softmax(wei, axis=-1)
    out = jnp.einsum('bhts,bhsd->bhtd', attn, v, precision=hp)       # (B, H, T, D)
    out = out.transpose(0, 2, 1, 3).reshape(B, T, H * D)             # head concat
    return jnp.dot(out, wp.reshape(H * D, C), precision=hp) + bp


if __name__ == "__main__":
    batch, seq = 2, 8                 # small test shapes (T <= block_size = 50)
    num_heads, head_size = 8, 64      # num_heads * head_size == n_embd == 512

    key = jax.random.PRNGKey(0)
    k_x, k_p = jax.random.split(key)
    x = jax.random.normal(k_x, (batch, seq, N_EMBD), jnp.float32)
    params = init_params(k_p, N_EMBD, num_heads, head_size, BLOCK_SIZE)

    y_ref = multihead_attention_ref(x, params)

    # f32 compute path.
    y32 = jax.block_until_ready(
        multihead_attention_pallas(x, params, compute_dtype=jnp.float32))
    assert y32.shape == x.shape and y32.dtype == x.dtype
    err32 = float(jnp.max(jnp.abs(y32 - y_ref)))
    assert err32 < 5e-2, f"f32 path max abs err {err32}"

    # bf16 compute path (MXU-peak dtype), looser numerical check.
    ybf = jax.block_until_ready(
        multihead_attention_pallas(x, params, compute_dtype=jnp.bfloat16))
    assert ybf.shape == x.shape and ybf.dtype == x.dtype
    errbf = float(jnp.max(jnp.abs(ybf - y_ref)))
    assert errbf < 1e-1, f"bf16 path max abs err {errbf}"

    print("KERNEL_OK")
</pallas_src>

<mosaic_0001>
module attributes {stable_mosaic.version = 11 : i64} {
  func.func @mha_kernel(%arg0: i32, %arg1: i32, %arg2: memref<1x8x512xf32, #tpu.memory_space<vmem>>, %arg3: memref<1x512x64xf32, #tpu.memory_space<vmem>>, %arg4: memref<1x512x64xf32, #tpu.memory_space<vmem>>, %arg5: memref<1x512x64xf32, #tpu.memory_space<vmem>>, %arg6: memref<1x8x8x64xf32, #tpu.memory_space<vmem>>, %arg7: memref<1x64x512xf32, #tpu.memory_space<vmem>>, %arg8: memref<1x512xf32, #tpu.memory_space<vmem>>, %arg9: memref<1x8x512xf32, #tpu.memory_space<vmem>>, %arg10: memref<8x512xf32, #tpu.memory_space<vmem>>) attributes {dimension_semantics = [#tpu.dimension_semantics<parallel>, #tpu.dimension_semantics<arbitrary>], iteration_bounds = array<i64: 2, 8>, scalar_prefetch = 0 : i64, scratch_operands = 1 : i64, tpu.core_type = #tpu.core_type<tc>, window_params = [{transform_indices = @transform_0, window_bounds = array<i64: 1, 8, 512>}, {transform_indices = @transform_1, window_bounds = array<i64: 1, 512, 64>}, {transform_indices = @transform_2, window_bounds = array<i64: 1, 512, 64>}, {transform_indices = @transform_3, window_bounds = array<i64: 1, 512, 64>}, {transform_indices = @transform_4, window_bounds = array<i64: 1, 8, 8, 64>}, {transform_indices = @transform_5, window_bounds = array<i64: 1, 64, 512>}, {pipeline_mode = #tpu.pipeline_mode<synchronous>, transform_indices = @transform_6, window_bounds = array<i64: 1, 512>}, {transform_indices = @transform_7, window_bounds = array<i64: 1, 8, 512>}]} {
    %c0_i32 = arith.constant 0 : i32
    %0 = arith.cmpi eq, %arg1, %c0_i32 : i32
    %1 = arith.extui %0 : i1 to i32
    %c0_i32_0 = arith.constant 0 : i32
    %2 = arith.cmpi ne, %1, %c0_i32_0 : i32
    scf.if %2 {
      %cst_34 = arith.constant 0.000000e+00 : f32
      %48 = vector.broadcast %cst_34 : f32 to vector<8x512xf32>
      %c0_35 = arith.constant 0 : index
      %c0_36 = arith.constant 0 : index
      %49 = vector.load %arg10[%c0_35, %c0_36] : memref<8x512xf32, #tpu.memory_space<vmem>>, vector<8x512xf32>
      tpu.vector_store %arg10[%c0_35, %c0_36], %48 {strides = array<i32>} : memref<8x512xf32, #tpu.memory_space<vmem>>, vector<8x512xf32>,
    } else {
    }
    %c0 = arith.constant 0 : index
    %c0_1 = arith.constant 0 : index
    %c0_2 = arith.constant 0 : index
    %3 = vector.load %arg2[%c0, %c0_1, %c0_2] : memref<1x8x512xf32, #tpu.memory_space<vmem>>, vector<1x8x512xf32>
    %4 = vector.shape_cast %3 : vector<1x8x512xf32> to vector<8x512xf32>
    %c0_3 = arith.constant 0 : index
    %c0_4 = arith.constant 0 : index
    %c0_5 = arith.constant 0 : index
    %5 = vector.load %arg3[%c0_3, %c0_4, %c0_5] : memref<1x512x64xf32, #tpu.memory_space<vmem>>, vector<1x512x64xf32>
    %6 = vector.shape_cast %5 : vector<1x512x64xf32> to vector<512x64xf32>
    %cst = arith.constant dense<0.000000e+00> : vector<8x64xf32>
    %7 = tpu.matmul %4, %6, %cst {dimension_numbers = #tpu.dot_dimension_numbers<[1], [0], [0], [1], [0, 0, 1, 1], [], []>} : vector<8x512xf32>, vector<512x64xf32>, vector<8x64xf32> -> vector<8x64xf32>
    %c0_6 = arith.constant 0 : index
    %c0_7 = arith.constant 0 : index
    %c0_8 = arith.constant 0 : index
    %8 = vector.load %arg4[%c0_6, %c0_7, %c0_8] : memref<1x512x64xf32, #tpu.memory_space<vmem>>, vector<1x512x64xf32>
    %9 = vector.shape_cast %8 : vector<1x512x64xf32> to vector<512x64xf32>
    %cst_9 = arith.constant dense<0.000000e+00> : vector<8x64xf32>
    %10 = tpu.matmul %4, %9, %cst_9 {dimension_numbers = #tpu.dot_dimension_numbers<[1], [0], [0], [1], [0, 0, 1, 1], [], []>} : vector<8x512xf32>, vector<512x64xf32>, vector<8x64xf32> -> vector<8x64xf32>
    %c0_10 = arith.constant 0 : index
    %c0_11 = arith.constant 0 : index
    %c0_12 = arith.constant 0 : index
    %11 = vector.load %arg5[%c0_10, %c0_11, %c0_12] : memref<1x512x64xf32, #tpu.memory_space<vmem>>, vector<1x512x64xf32>
    %12 = vector.shape_cast %11 : vector<1x512x64xf32> to vector<512x64xf32>
    %cst_13 = arith.constant dense<0.000000e+00> : vector<8x64xf32>
    %13 = tpu.matmul %4, %12, %cst_13 {dimension_numbers = #tpu.dot_dimension_numbers<[1], [0], [0], [1], [0, 0, 1, 1], [], []>} : vector<8x512xf32>, vector<512x64xf32>, vector<8x64xf32> -> vector<8x64xf32>
    %cst_14 = arith.constant dense<0.000000e+00> : vector<8x8xf32>
    %14 = tpu.matmul %7, %10, %cst_14 {dimension_numbers = #tpu.dot_dimension_numbers<[1], [1], [0], [0], [0, 0, 1, 0], [], []>} : vector<8x64xf32>, vector<8x64xf32>, vector<8x8xf32> -> vector<8x8xf32>
    %cst_15 = arith.constant 1.250000e-01 : f32
    %15 = vector.broadcast %cst_15 : f32 to vector<8x8xf32>
    %16 = arith.mulf %14, %15 : vector<8x8xf32>
    %c0_16 = arith.constant 0 : index
    %c0_17 = arith.constant 0 : index
    %c0_18 = arith.constant 0 : index
    %c0_19 = arith.constant 0 : index
    %17 = vector.load %arg6[%c0_16, %c0_17, %c0_18, %c0_19] : memref<1x8x8x64xf32, #tpu.memory_space<vmem>>, vector<1x8x8x64xf32>
    %18 = vector.shape_cast %17 : vector<1x8x8x64xf32> to vector<8x8x64xf32>
    %19 = vector.shape_cast %7 : vector<8x64xf32> to vector<8x1x64xf32>
    %20 = vector.broadcast %19 : vector<8x1x64xf32> to vector<8x8x64xf32>
    %21 = arith.mulf %20, %18 : vector<8x8x64xf32>
    %cst_20 = arith.constant dense<0.000000e+00> : vector<8x8xf32>
    %22 = vector.multi_reduction <add>, %21, %cst_20 [2] : vector<8x8x64xf32> to vector<8x8xf32>
    %23 = arith.addf %16, %22 : vector<8x8xf32>
    %24 = tpu.iota {dimensions = array<i32: 0>} : vector<8x8xi32>
    %25 = tpu.iota {dimensions = array<i32: 1>} : vector<8x8xi32>
    %26 = arith.cmpi sle, %25, %24 : vector<8x8xi32>
    %cst_21 = arith.constant -1.000000e+30 : f32
    %27 = vector.broadcast %cst_21 : f32 to vector<8x8xf32>
    %28 = arith.select %26, %23, %27 : vector<8x8xi1>, vector<8x8xf32>
    %cst_22 = arith.constant dense<0xFF800000> : vector<8xf32>
    %29 = vector.multi_reduction <maximumf>, %28, %cst_22 [1] : vector<8x8xf32> to vector<8xf32>
    %30 = vector.shape_cast %29 : vector<8xf32> to vector<8x1xf32>
    %31 = vector.broadcast %30 : vector<8x1xf32> to vector<8x8xf32>
    %32 = arith.subf %28, %31 : vector<8x8xf32>
    %33 = math.exp %32 : vector<8x8xf32>
    %cst_23 = arith.constant dense<0.000000e+00> : vector<8xf32>
    %34 = vector.multi_reduction <add>, %33, %cst_23 [1] : vector<8x8xf32> to vector<8xf32>
    %35 = vector.shape_cast %34 : vector<8xf32> to vector<8x1xf32>
    %36 = vector.broadcast %35 : vector<8x1xf32> to vector<8x8xf32>
    %37 = arith.divf %33, %36 : vector<8x8xf32>
    %cst_24 = arith.constant dense<0.000000e+00> : vector<8x64xf32>
    %38 = tpu.matmul %37, %13, %cst_24 {dimension_numbers = #tpu.dot_dimension_numbers<[1], [0], [0], [1], [0, 0, 1, 1], [], []>} : vector<8x8xf32>, vector<8x64xf32>, vector<8x64xf32> -> vector<8x64xf32>
    %c0_25 = arith.constant 0 : index
    %c0_26 = arith.constant 0 : index
    %39 = vector.load %arg10[%c0_25, %c0_26] : memref<8x512xf32, #tpu.memory_space<vmem>>, vector<8x512xf32>
    %c0_27 = arith.constant 0 : index
    %c0_28 = arith.constant 0 : index
    %c0_29 = arith.constant 0 : index
    %40 = vector.load %arg7[%c0_27, %c0_28, %c0_29] : memref<1x64x512xf32, #tpu.memory_space<vmem>>, vector<1x64x512xf32>
    %41 = vector.shape_cast %40 : vector<1x64x512xf32> to vector<64x512xf32>
    %cst_30 = arith.constant dense<0.000000e+00> : vector<8x512xf32>
    %42 = tpu.matmul %38, %41, %cst_30 {dimension_numbers = #tpu.dot_dimension_numbers<[1], [0], [0], [1], [0, 0, 1, 1], [], []>} : vector<8x64xf32>, vector<64x512xf32>, vector<8x512xf32> -> vector<8x512xf32>
    %43 = arith.addf %39, %42 : vector<8x512xf32>
    %c0_31 = arith.constant 0 : index
    %c0_32 = arith.constant 0 : index
    %44 = vector.load %arg10[%c0_31, %c0_32] : memref<8x512xf32, #tpu.memory_space<vmem>>, vector<8x512xf32>
    tpu.vector_store %arg10[%c0_31, %c0_32], %43 {strides = array<i32>} : memref<8x512xf32, #tpu.memory_space<vmem>>, vector<8x512xf32>,
    %c7_i32 = arith.constant 7 : i32
    %45 = arith.cmpi eq, %arg1, %c7_i32 : i32
    %46 = arith.extui %45 : i1 to i32
    %c0_i32_33 = arith.constant 0 : i32
    %47 = arith.cmpi ne, %46, %c0_i32_33 : i32
    scf.if %47 {
      %c0_34 = arith.constant 0 : index
      %c0_35 = arith.constant 0 : index
      %48 = vector.load %arg10[%c0_34, %c0_35] : memref<8x512xf32, #tpu.memory_space<vmem>>, vector<8x512xf32>
      %c0_36 = arith.constant 0 : index
      %c0_37 = arith.constant 0 : index
      %49 = vector.load %arg8[%c0_36, %c0_37] : memref<1x512xf32, #tpu.memory_space<vmem>>, vector<1x512xf32>
      %50 = vector.broadcast %49 : vector<1x512xf32> to vector<8x512xf32>
      %51 = arith.addf %48, %50 : vector<8x512xf32>
      %c0_38 = arith.constant 0 : index
      %c0_39 = arith.constant 0 : index
      %c0_40 = arith.constant 0 : index
      %52 = vector.load %arg9[%c0_38, %c0_39, %c0_40] : memref<1x8x512xf32, #tpu.memory_space<vmem>>, vector<1x8x512xf32>
      %53 = vector.shape_cast %52 : vector<1x8x512xf32> to vector<8x512xf32>
      %54 = vector.shape_cast %51 : vector<8x512xf32> to vector<1x8x512xf32>
      tpu.vector_store %arg9[%c0_38, %c0_39, %c0_40], %54 {strides = array<i32>} : memref<1x8x512xf32, #tpu.memory_space<vmem>>, vector<1x8x512xf32>,
    } else {
    }
    return
  }
  func.func @transform_0(%arg0: i32, %arg1: i32) -> (i32, i32, i32) {
    %c0_i32 = arith.constant 0 : i32
    %c0_i32_0 = arith.constant 0 : i32
    %c0_i32_1 = arith.constant 0 : i32
    return %arg0, %c0_i32, %c0_i32_0 : i32, i32, i32
  }
  func.func @transform_1(%arg0: i32, %arg1: i32) -> (i32, i32, i32) {
    %c0_i32 = arith.constant 0 : i32
    %c0_i32_0 = arith.constant 0 : i32
    %c0_i32_1 = arith.constant 0 : i32
    return %arg1, %c0_i32, %c0_i32_0 : i32, i32, i32
  }
  func.func @transform_2(%arg0: i32, %arg1: i32) -> (i32, i32, i32) {
    %c0_i32 = arith.constant 0 : i32
    %c0_i32_0 = arith.constant 0 : i32
    %c0_i32_1 = arith.constant 0 : i32
    return %arg1, %c0_i32, %c0_i32_0 : i32, i32, i32
  }
  func.func @transform_3(%arg0: i32, %arg1: i32) -> (i32, i32, i32) {
    %c0_i32 = arith.constant 0 : i32
    %c0_i32_0 = arith.constant 0 : i32
    %c0_i32_1 = arith.constant 0 : i32
    return %arg1, %c0_i32, %c0_i32_0 : i32, i32, i32
  }
  func.func @transform_4(%arg0: i32, %arg1: i32) -> (i32, i32, i32, i32) {
    %c0_i32 = arith.constant 0 : i32
    %c0_i32_0 = arith.constant 0 : i32
    %c0_i32_1 = arith.constant 0 : i32
    %c0_i32_2 = arith.constant 0 : i32
    return %arg1, %c0_i32, %c0_i32_0, %c0_i32_1 : i32, i32, i32, i32
  }
  func.func @transform_5(%arg0: i32, %arg1: i32) -> (i32, i32, i32) {
    %c0_i32 = arith.constant 0 : i32
    %c0_i32_0 = arith.constant 0 : i32
    %c0_i32_1 = arith.constant 0 : i32
    return %arg1, %c0_i32, %c0_i32_0 : i32, i32, i32
  }
  func.func @transform_6(%arg0: i32, %arg1: i32) -> (i32, i32) {
    %c0_i32 = arith.constant 0 : i32
    %c0_i32_0 = arith.constant 0 : i32
    %c0_i32_1 = arith.constant 0 : i32
    return %c0_i32, %c0_i32_0 : i32, i32
  }
  func.func @transform_7(%arg0: i32, %arg1: i32) -> (i32, i32, i32) {
    %c0_i32 = arith.constant 0 : i32
    %c0_i32_0 = arith.constant 0 : i32
    %c0_i32_1 = arith.constant 0 : i32
    return %arg0, %c0_i32, %c0_i32_0 : i32, i32, i32
  }
}

</mosaic_0001>

<llo_original>
// kernel: tpu_custom_call.1
$region0: #{tpu_custom_call.1}
  #allocation0 [shape = 'u32[]', space=smem, size = 0x4, offset = 0x4, fixed_abs, tag = 'smem constant byte address 0x4 - core index']
  #allocation1 [shape = 'u32[144,128]{1,0:T(1,128)}', space=vmem, size = 0x12000, scoped, tag = 'internal scratch']
  #allocation2 [shape = 'f32[8,512]{1,0:T(8,128)}', space=vmem, size = 0x4000, scoped, tag = 'scratch operand']
  %s0 = inlined_call_operand.vmem [shape: f32[2,8,512], index: 0, kind: input, shape index: {}]
  %s1 = inlined_call_operand.vmem [shape: f32[8,512,64], index: 1, kind: input, shape index: {}]
  %s2 = inlined_call_operand.vmem [shape: f32[8,512,64], index: 2, kind: input, shape index: {}]
  %s3 = inlined_call_operand.vmem [shape: f32[8,512,64], index: 3, kind: input, shape index: {}]
  %s4 = inlined_call_operand.vmem [shape: f32[8,8,8,64], index: 4, kind: input, shape index: {}]
  %s5 = inlined_call_operand.vmem [shape: f32[8,64,512], index: 5, kind: input, shape index: {}]
  %s6 = inlined_call_operand.vmem [shape: f32[1,512], index: 6, kind: input, shape index: {}]
  %s7 = inlined_call_operand.hbm [shape: f32[2,8,512], index: 7, kind: output, shape index: {}]
  %s8 = sld [smem:[#allocation0]]
  $region69: #{tpu_custom_call.1} parent=0
    _
  %s10 = ssub.s32 1, %s8
  %s11 = scalar_select 0, %s10, %s8
  $region1: #{tpu_custom_call.1} parent=0
    #allocation3 [shape = 'u8[32768]{0}', space=vmem, size = 0x8000, scoped, tag = 'output window, operand 0']
    #allocation4 [shape = 's32[2]{0}', space=sflag, size = 0x8, scoped, tag = 'scoped memory for tpu_custom_call.1']
    %12 = vsyncpa [#allocation4], 0
    %s13 = scalar_lea.sflag [#allocation4], 1
    %14 = vsyncpa %s13, 0
    loop: start=0, step=1, limit=18
    $region2: #{tpu_custom_call.1} parent=1 // loop_pre_header
      _
    $region3: #{tpu_custom_call.1} parent=1 // loop_header
      %s16 = sphi 0, %s20
      %p17 = scmp.ge.s32.totalorder %s16, 18
      %s23 = sphi 0, %s35
      %s24 = sphi 0, %s31
      %s25 = sphi 0, %s23
      %s26 = sphi 0, %s24
      %s27 = sphi 0, %s25
      %s28 = sphi 0, %s26
      %s38 = sphi 0, %s40
      %s41 = sphi 0, %s38
      %s42 = sphi 0, %s41
      %s58 = sphi 0, %s42
      %s64 = sphi 0, %s66
      %s67 = sphi 0, %s64
      %s68 = sphi 0, %s67
      %s84 = sphi 0, %s68
      %s90 = sphi 0, %s92
      %s93 = sphi 0, %s90
      %s94 = sphi 0, %s93
      %s110 = sphi 0, %s94
      %s116 = sphi 0, %s118
      %s119 = sphi 0, %s116
      %s120 = sphi 0, %s119
      %s136 = sphi 0, %s120
      %s142 = sphi 0, %s144
      %s145 = sphi 0, %s142
      %s146 = sphi 0, %s145
      %s162 = sphi 0, %s146
      %s168 = sphi 0, %s170
      %s171 = sphi 0, %s168
      %s172 = sphi 0, %s171
      %s188 = sphi 0, %s172
      %s192 = sphi 0, %s192
      %s194 = sphi 0, %s192
      %s195 = sphi 0, %s194
      %s209 = sphi 0, %s195
      %s215 = sphi 0, %s217
      %s218 = sphi 0, %s215
      %s219 = sphi 0, %s218
      %s235 = sphi 0, %s219
    $region4: #{tpu_custom_call.1} parent=1 // loop_header_branch
      %19 = sbr.rel (%p17) target = $region8
    $region5: #{tpu_custom_call.1} parent=1 // loop_body
      %s21 = ssub.s32 %s16, 1
      %s22 = ssub.s32 %s16, 2
      %s29 = sadd.s32 1, %s24
      %p30 = scmp.ge.s32.totalorder %s29, 8
      %s31 = scalar_select %p30, 0, %s29
      %s32 = sadd.s32 1, %s23
      %s33 = scalar_select %p30, %s32, %s23
      %p34 = scmp.ge.s32.totalorder %s33, 2
      %s35 = scalar_select %p34, 0, %s33
      %s36 = ssub.s32 %s23, %s35
      %p37 = scmp.eq.s32.totalorder %s36, 0
      %s39 = sadd.s32 %s38, 1
      %s40 = scalar_select %p37, %s38, %s39
      %p43 = pneg %p37
      %p44 = scmp.eq.s32.totalorder %s16, 15
      %p45 = por %p43, %p44
      %p46 = scmp.ne.s32.totalorder %s38, %s41
      %p47 = scmp.eq.s32.totalorder %s16, 0
      %p48 = por %p46, %p47
      %p49 = scmp.ne.s32.totalorder %s38, %s41
      %p50 = scmp.eq.s32.totalorder %s21, 15
      %p51 = por %p49, %p50
      %p52 = scmp.ne.s32.totalorder %s41, %s42
      %p53 = scmp.eq.s32.totalorder %s21, 0
      %p54 = por %p52, %p53
      %p55 = scmp.ne.s32.totalorder %s41, %s42
      %p56 = scmp.eq.s32.totalorder %s22, 15
      %p57 = por %p55, %p56
      %p59 = scmp.ne.s32.totalorder %s42, %s58
      %p60 = scmp.eq.s32.totalorder %s22, 0
      %p61 = por %p59, %p60
      %s62 = ssub.s32 %s24, %s31
      %p63 = scmp.eq.s32.totalorder %s62, 0
      %s65 = sadd.s32 %s64, 1
      %s66 = scalar_select %p63, %s64, %s65
      %p69 = pneg %p63
      %p70 = scmp.eq.s32.totalorder %s16, 15
      %p71 = por %p69, %p70
      %p72 = scmp.ne.s32.totalorder %s64, %s67
      %p73 = scmp.eq.s32.totalorder %s16, 0
      %p74 = por %p72, %p73
      %p75 = scmp.ne.s32.totalorder %s64, %s67
      %p76 = scmp.eq.s32.totalorder %s21, 15
      %p77 = por %p75, %p76
      %p78 = scmp.ne.s32.totalorder %s67, %s68
      %p79 = scmp.eq.s32.totalorder %s21, 0
      %p80 = por %p78, %p79
      %p81 = scmp.ne.s32.totalorder %s67, %s68
      %p82 = scmp.eq.s32.totalorder %s22, 15
      %p83 = por %p81, %p82
      %p85 = scmp.ne.s32.totalorder %s68, %s84
      %p86 = scmp.eq.s32.totalorder %s22, 0
      %p87 = por %p85, %p86
      %s88 = ssub.s32 %s24, %s31
      %p89 = scmp.eq.s32.totalorder %s88, 0
      %s91 = sadd.s32 %s90, 1
      %s92 = scalar_select %p89, %s90, %s91
      %p95 = pneg %p89
      %p96 = scmp.eq.s32.totalorder %s16, 15
      %p97 = por %p95, %p96
      %p98 = scmp.ne.s32.totalorder %s90, %s93
      %p99 = scmp.eq.s32.totalorder %s16, 0
      %p100 = por %p98, %p99
      %p101 = scmp.ne.s32.totalorder %s90, %s93
      %p102 = scmp.eq.s32.totalorder %s21, 15
      %p103 = por %p101, %p102
      %p104 = scmp.ne.s32.totalorder %s93, %s94
      %p105 = scmp.eq.s32.totalorder %s21, 0
      %p106 = por %p104, %p105
      %p107 = scmp.ne.s32.totalorder %s93, %s94
      %p108 = scmp.eq.s32.totalorder %s22, 15
      %p109 = por %p107, %p108
      %p111 = scmp.ne.s32.totalorder %s94, %s110
      %p112 = scmp.eq.s32.totalorder %s22, 0
      %p113 = por %p111, %p112
      %s114 = ssub.s32 %s24, %s31
      %p115 = scmp.eq.s32.totalorder %s114, 0
      %s117 = sadd.s32 %s116, 1
      %s118 = scalar_select %p115, %s116, %s117
      %p121 = pneg %p115
      %p122 = scmp.eq.s32.totalorder %s16, 15
      %p123 = por %p121, %p122
      %p124 = scmp.ne.s32.totalorder %s116, %s119
      %p125 = scmp.eq.s32.totalorder %s16, 0
      %p126 = por %p124, %p125
      %p127 = scmp.ne.s32.totalorder %s116, %s119
      %p128 = scmp.eq.s32.totalorder %s21, 15
      %p129 = por %p127, %p128
      %p130 = scmp.ne.s32.totalorder %s119, %s120
      %p131 = scmp.eq.s32.totalorder %s21, 0
      %p132 = por %p130, %p131
      %p133 = scmp.ne.s32.totalorder %s119, %s120
      %p134 = scmp.eq.s32.totalorder %s22, 15
      %p135 = por %p133, %p134
      %p137 = scmp.ne.s32.totalorder %s120, %s136
      %p138 = scmp.eq.s32.totalorder %s22, 0
      %p139 = por %p137, %p138
      %s140 = ssub.s32 %s24, %s31
      %p141 = scmp.eq.s32.totalorder %s140, 0
      %s143 = sadd.s32 %s142, 1
      %s144 = scalar_select %p141, %s142, %s143
      %p147 = pneg %p141
      %p148 = scmp.eq.s32.totalorder %s16, 15
      %p149 = por %p147, %p148
      %p150 = scmp.ne.s32.totalorder %s142, %s145
      %p151 = scmp.eq.s32.totalorder %s16, 0
      %p152 = por %p150, %p151
      %p153 = scmp.ne.s32.totalorder %s142, %s145
      %p154 = scmp.eq.s32.totalorder %s21, 15
      %p155 = por %p153, %p154
      %p156 = scmp.ne.s32.totalorder %s145, %s146
      %p157 = scmp.eq.s32.totalorder %s21, 0
      %p158 = por %p156, %p157
      %p159 = scmp.ne.s32.totalorder %s145, %s146
      %p160 = scmp.eq.s32.totalorder %s22, 15
      %p161 = por %p159, %p160
      %p163 = scmp.ne.s32.totalorder %s146, %s162
      %p164 = scmp.eq.s32.totalorder %s22, 0
      %p165 = por %p163, %p164
      %s166 = ssub.s32 %s24, %s31
      %p167 = scmp.eq.s32.totalorder %s166, 0
      %s169 = sadd.s32 %s168, 1
      %s170 = scalar_select %p167, %s168, %s169
      %p173 = pneg %p167
      %p174 = scmp.eq.s32.totalorder %s16, 15
      %p175 = por %p173, %p174
      %p176 = scmp.ne.s32.totalorder %s168, %s171
      %p177 = scmp.eq.s32.totalorder %s16, 0
      %p178 = por %p176, %p177
      %p179 = scmp.ne.s32.totalorder %s168, %s171
      %p180 = scmp.eq.s32.totalorder %s21, 15
      %p181 = por %p179, %p180
      %p182 = scmp.ne.s32.totalorder %s171, %s172
      %p183 = scmp.eq.s32.totalorder %s21, 0
      %p184 = por %p182, %p183
      %p185 = scmp.ne.s32.totalorder %s171, %s172
      %p186 = scmp.eq.s32.totalorder %s22, 15
      %p187 = por %p185, %p186
      %p189 = scmp.ne.s32.totalorder %s172, %s188
      %p190 = scmp.eq.s32.totalorder %s22, 0
      %p191 = por %p189, %p190
      %s193 = sadd.s32 %s192, 1
      %p196 = scmp.eq.s32.totalorder %s16, 15
      %p197 = scmp.ne.s32.totalorder %s192, %s194
      %p198 = scmp.eq.s32.totalorder %s16, 0
      %p199 = por %p197, %p198
      %p200 = scmp.ne.s32.totalorder %s192, %s194
      %p201 = scmp.eq.s32.totalorder %s21, 15
      %p202 = por %p200, %p201
      %p203 = scmp.ne.s32.totalorder %s194, %s195
      %p204 = scmp.eq.s32.totalorder %s21, 0
      %p205 = por %p203, %p204
      %p206 = scmp.ne.s32.totalorder %s194, %s195
      %p207 = scmp.eq.s32.totalorder %s22, 15
      %p208 = por %p206, %p207
      %p210 = scmp.ne.s32.totalorder %s195, %s209
      %p211 = scmp.eq.s32.totalorder %s22, 0
      %p212 = por %p210, %p211
      %s213 = ssub.s32 %s23, %s35
      %p214 = scmp.eq.s32.totalorder %s213, 0
      %s216 = sadd.s32 %s215, 1
      %s217 = scalar_select %p214, %s215, %s216
      %p220 = pneg %p214
      %p221 = scmp.eq.s32.totalorder %s16, 15
      %p222 = por %p220, %p221
      %p223 = scmp.ne.s32.totalorder %s215, %s218
      %p224 = scmp.eq.s32.totalorder %s16, 0
      %p225 = por %p223, %p224
      %p226 = scmp.ne.s32.totalorder %s215, %s218
      %p227 = scmp.eq.s32.totalorder %s21, 15
      %p228 = por %p226, %p227
      %p229 = scmp.ne.s32.totalorder %s218, %s219
      %p230 = scmp.eq.s32.totalorder %s21, 0
      %p231 = por %p229, %p230
      %p232 = scmp.ne.s32.totalorder %s218, %s219
      %p233 = scmp.eq.s32.totalorder %s22, 15
      %p234 = por %p232, %p233
      %p236 = scmp.ne.s32.totalorder %s219, %s235
      %p237 = scmp.eq.s32.totalorder %s22, 0
      %p238 = por %p236, %p237
      %p239 = scmp.le.s32.totalorder 1, %s16
      %p240 = scmp.lt.s32.totalorder %s16, 17
      %p241 = pnand %p239, %p240
      %p242 = pneg %p241
      // Predicated region
      $region9: #{tpu_custom_call.1} parent=5 // pred_check
        _
      $region10: #{tpu_custom_call.1} parent=5 // pred_check_branch
        %244 = sbr.rel (%p241) target = $region12
      $region11: #{tpu_custom_call.1} parent=5 // pred_region
        %s245 = ssub.s32 %s16, 1
        // Predicated region
        $region13: #{tpu_custom_call.1} parent=11 // pred_check
          %p246 = pneg %p205
        $region14: #{tpu_custom_call.1} parent=11 // pred_check_branch
          %248 = sbr.rel (%p246) target = $region16
        $region15: #{tpu_custom_call.1} parent=11 // pred_region
          _
        $region16: #{tpu_custom_call.1} parent=11 // pred_fallthru
          _
      $region12: #{tpu_custom_call.1} parent=5 // pred_fallthru
        _
      %p249 = scmp.lt.s32.totalorder %s16, 16
      // Predicated region
      $region17: #{tpu_custom_call.1} parent=5 // pred_check
        %p250 = pneg %p249
      $region18: #{tpu_custom_call.1} parent=5 // pred_check_branch
        %252 = sbr.rel (%p250) target = $region20
      $region19: #{tpu_custom_call.1} parent=5 // pred_region
        // Predicated region
        $region21: #{tpu_custom_call.1} parent=19 // pred_check
          %p253 = pneg %p48
        $region22: #{tpu_custom_call.1} parent=19 // pred_check_branch
          %255 = sbr.rel (%p253) target = $region24
        $region23: #{tpu_custom_call.1} parent=19 // pred_region
          %p256 = scmp.lt.s32.totalorder %s23, 1
          %s257 = scalar_select %p256, %s23, 1
          %s258 = smul.addr %s257, 4
          %s259 = smul.addr %s258, 8
          %s260 = scalar_lea.vmem %s0, %s259
        $region24: #{tpu_custom_call.1} parent=19 // pred_fallthru
          _
        // Predicated region
        $region25: #{tpu_custom_call.1} parent=19 // pred_check
          %p261 = pneg %p74
        $region26: #{tpu_custom_call.1} parent=19 // pred_check_branch
          %263 = sbr.rel (%p261) target = $region28
        $region27: #{tpu_custom_call.1} parent=19 // pred_region
          %p264 = scmp.lt.s32.totalorder %s24, 7
          %s265 = scalar_select %p264, %s24, 7
          %s266 = smul.addr %s265, 64
          %s267 = smul.addr %s266, 8
          %s268 = scalar_lea.vmem %s1, %s267
        $region28: #{tpu_custom_call.1} parent=19 // pred_fallthru
          _
        // Predicated region
        $region29: #{tpu_custom_call.1} parent=19 // pred_check
          %p269 = pneg %p100
        $region30: #{tpu_custom_call.1} parent=19 // pred_check_branch
          %271 = sbr.rel (%p269) target = $region32
        $region31: #{tpu_custom_call.1} parent=19 // pred_region
          %p272 = scmp.lt.s32.totalorder %s24, 7
          %s273 = scalar_select %p272, %s24, 7
          %s274 = smul.addr %s273, 64
          %s275 = smul.addr %s274, 8
          %s276 = scalar_lea.vmem %s2, %s275
        $region32: #{tpu_custom_call.1} parent=19 // pred_fallthru
          _
        // Predicated region
        $region33: #{tpu_custom_call.1} parent=19 // pred_check
          %p277 = pneg %p126
        $region34: #{tpu_custom_call.1} parent=19 // pred_check_branch
          %279 = sbr.rel (%p277) target = $region36
        $region35: #{tpu_custom_call.1} parent=19 // pred_region
          %p280 = scmp.lt.s32.totalorder %s24, 7
          %s281 = scalar_select %p280, %s24, 7
          %s282 = smul.addr %s281, 64
          %s283 = smul.addr %s282, 8
          %s284 = scalar_lea.vmem %s3, %s283
        $region36: #{tpu_custom_call.1} parent=19 // pred_fallthru
          _
        // Predicated region
        $region37: #{tpu_custom_call.1} parent=19 // pred_check
          %p285 = pneg %p152
        $region38: #{tpu_custom_call.1} parent=19 // pred_check_branch
          %287 = sbr.rel (%p285) target = $region40
        $region39: #{tpu_custom_call.1} parent=19 // pred_region
          %p288 = scmp.lt.s32.totalorder %s24, 7
          %s289 = scalar_select %p288, %s24, 7
          %s290 = smul.addr %s289, 8
          %s291 = smul.addr %s290, 8
          %s292 = scalar_lea.vmem %s4, %s291
        $region40: #{tpu_custom_call.1} parent=19 // pred_fallthru
          _
        // Predicated region
        $region41: #{tpu_custom_call.1} parent=19 // pred_check
          %p293 = pneg %p178
        $region42: #{tpu_custom_call.1} parent=19 // pred_check_branch
          %295 = sbr.rel (%p293) target = $region44
        $region43: #{tpu_custom_call.1} parent=19 // pred_region
          %p296 = scmp.lt.s32.totalorder %s24, 7
          %s297 = scalar_select %p296, %s24, 7
          %s298 = smul.addr %s297, 32
          %s299 = smul.addr %s298, 8
          %s300 = scalar_lea.vmem %s5, %s299
        $region44: #{tpu_custom_call.1} parent=19 // pred_fallthru
          _
      $region20: #{tpu_custom_call.1} parent=5 // pred_fallthru
        _
      %p301 = scmp.le.s32.totalorder 1, %s16
      %p302 = scmp.lt.s32.totalorder %s16, 17
      %p303 = pnand %p301, %p302
      %p304 = pneg %p303
      // Predicated region
      $region45: #{tpu_custom_call.1} parent=5 // pred_check
        _
      $region46: #{tpu_custom_call.1} parent=5 // pred_check_branch
        %306 = sbr.rel (%p303) target = $region48
      $region47: #{tpu_custom_call.1} parent=5 // pred_region
        %s307 = ssub.s32 %s16, 1
        %p308 = scmp.lt.s32.totalorder %s25, 1
        %s309 = scalar_select %p308, %s25, 1
        %s310 = smul.addr %s309, 4
        %s311 = smul.addr %s310, 8
        %s312 = scalar_lea.vmem %s0, %s311
        %p313 = pneg %p54
        %p314 = pneg %p51
        %p315 = scmp.lt.s32.totalorder %s26, 7
        %s316 = scalar_select %p315, %s26, 7
        %s317 = smul.addr %s316, 64
        %s318 = smul.addr %s317, 8
        %s319 = scalar_lea.vmem %s1, %s318
        %p320 = pneg %p80
        %p321 = pneg %p77
        %p322 = scmp.lt.s32.totalorder %s26, 7
        %s323 = scalar_select %p322, %s26, 7
        %s324 = smul.addr %s323, 64
        %s325 = smul.addr %s324, 8
        %s326 = scalar_lea.vmem %s2, %s325
        %p327 = pneg %p106
        %p328 = pneg %p103
        %p329 = scmp.lt.s32.totalorder %s26, 7
        %s330 = scalar_select %p329, %s26, 7
        %s331 = smul.addr %s330, 64
        %s332 = smul.addr %s331, 8
        %s333 = scalar_lea.vmem %s3, %s332
        %p334 = pneg %p132
        %p335 = pneg %p129
        %p336 = scmp.lt.s32.totalorder %s26, 7
        %s337 = scalar_select %p336, %s26, 7
        %s338 = smul.addr %s337, 8
        %s339 = smul.addr %s338, 8
        %s340 = scalar_lea.vmem %s4, %s339
        %p341 = pneg %p158
        %p342 = pneg %p155
        %p343 = scmp.lt.s32.totalorder %s26, 7
        %s344 = scalar_select %p343, %s26, 7
        %s345 = smul.addr %s344, 32
        %s346 = smul.addr %s345, 8
        %s347 = scalar_lea.vmem %s5, %s346
        %p348 = pneg %p184
        %p349 = pneg %p181
        %p350 = pneg %p205
        %p351 = pneg %p202
        %p352 = pneg %p231
        %p353 = pneg %p228
        %s354 = sand.u32 %s218, 1
        %s355 = scalar_lea.sflag [#allocation4], %s354
        %s356 = sand.u32 %s218, 1
        %s357 = smul.addr %s356, 32
        %s358 = scalar_lea.vmem [#allocation3], %s357
        %p359 = scmp.lt.s32.totalorder %s25, 1
        %s360 = scalar_select %p359, %s25, 1
        %s361 = smul.addr %s360, 4
        %s362 = smul.addr %s361, 8
        %s363 = scalar_lea.vmem %s0, %s362
        %p364 = scmp.lt.s32.totalorder %s26, 7
        %s365 = scalar_select %p364, %s26, 7
        %s366 = smul.addr %s365, 64
        %s367 = smul.addr %s366, 8
        %s368 = scalar_lea.vmem %s1, %s367
        %p369 = scmp.lt.s32.totalorder %s26, 7
        %s370 = scalar_select %p369, %s26, 7
        %s371 = smul.addr %s370, 64
        %s372 = smul.addr %s371, 8
        %s373 = scalar_lea.vmem %s2, %s372
        %p374 = scmp.lt.s32.totalorder %s26, 7
        %s375 = scalar_select %p374, %s26, 7
        %s376 = smul.addr %s375, 64
        %s377 = smul.addr %s376, 8
        %s378 = scalar_lea.vmem %s3, %s377
        %p379 = scmp.lt.s32.totalorder %s26, 7
        %s380 = scalar_select %p379, %s26, 7
        %s381 = smul.addr %s380, 8
        %s382 = smul.addr %s381, 8
        %s383 = scalar_lea.vmem %s4, %s382
        %p384 = scmp.lt.s32.totalorder %s26, 7
        %s385 = scalar_select %p384, %s26, 7
        %s386 = smul.addr %s385, 32
        %s387 = smul.addr %s386, 8
        %s388 = scalar_lea.vmem %s5, %s387
        %p389 = scmp.eq.s32.totalorder %s26, 0
        // Predicated region
        $region49: #{tpu_custom_call.1} parent=47 // pred_check
          %p390 = pneg %p389
        $region50: #{tpu_custom_call.1} parent=47 // pred_check_branch
          %392 = sbr.rel (%p390) target = $region52
        $region51: #{tpu_custom_call.1} parent=47 // pred_region
          %393 = vst [vmem:[#allocation2] sm:$0xff] 0.0
          %394 = vst [vmem:[#allocation2 + $0x8] sm:$0xff] 0.0
          %395 = vst [vmem:[#allocation2 + $0x10] sm:$0xff] 0.0
          %396 = vst [vmem:[#allocation2 + $0x18] sm:$0xff] 0.0
        $region52: #{tpu_custom_call.1} parent=47 // pred_fallthru
          _
        %v397 = vld [vmem:[%s363] sm:$0xff]
        %v398 = vld [vmem:[%s363 + $0x8] sm:$0xff]
        %v399 = vld [vmem:[%s363 + $0x10] sm:$0xff]
        %v400 = vld [vmem:[%s363 + $0x18] sm:$0xff]
        %v401 = vld [vmem:[%s368] sm:$0xff]
        %v402 = vld [vmem:[%s368 + $0x8] sm:$0xff]
        %v403 = vld [vmem:[%s368 + $0x10] sm:$0xff]
        %v404 = vld [vmem:[%s368 + $0x18] sm:$0xff]
        %v405 = vld [vmem:[%s368 + $0x20] sm:$0xff]
        %v406 = vld [vmem:[%s368 + $0x28] sm:$0xff]
        %v407 = vld [vmem:[%s368 + $0x30] sm:$0xff]
        %v408 = vld [vmem:[%s368 + $0x38] sm:$0xff]
        %v409 = vld [vmem:[%s368 + $0x40] sm:$0xff]
        %v410 = vld [vmem:[%s368 + $0x48] sm:$0xff]
        %v411 = vld [vmem:[%s368 + $0x50] sm:$0xff]
        %v412 = vld [vmem:[%s368 + $0x58] sm:$0xff]
        %v413 = vld [vmem:[%s368 + $0x60] sm:$0xff]
        %v414 = vld [vmem:[%s368 + $0x68] sm:$0xff]
        %v415 = vld [vmem:[%s368 + $0x70] sm:$0xff]
        %v416 = vld [vmem:[%s368 + $0x78] sm:$0xff]
        %v417 = vld [vmem:[%s368 + $0x80] sm:$0xff]
        %v418 = vld [vmem:[%s368 + $0x88] sm:$0xff]
        %v419 = vld [vmem:[%s368 + $0x90] sm:$0xff]
        %v420 = vld [vmem:[%s368 + $0x98] sm:$0xff]
        %v421 = vld [vmem:[%s368 + $0xa0] sm:$0xff]
        %v422 = vld [vmem:[%s368 + $0xa8] sm:$0xff]
        %v423 = vld [vmem:[%s368 + $0xb0] sm:$0xff]
        %v424 = vld [vmem:[%s368 + $0xb8] sm:$0xff]
        %v425 = vld [vmem:[%s368 + $0xc0] sm:$0xff]
        %v426 = vld [vmem:[%s368 + $0xc8] sm:$0xff]
        %v427 = vld [vmem:[%s368 + $0xd0] sm:$0xff]
        %v428 = vld [vmem:[%s368 + $0xd8] sm:$0xff]
        %v429 = vld [vmem:[%s368 + $0xe0] sm:$0xff]
        %v430 = vld [vmem:[%s368 + $0xe8] sm:$0xff]
        %v431 = vld [vmem:[%s368 + $0xf0] sm:$0xff]
        %v432 = vld [vmem:[%s368 + $0xf8] sm:$0xff]
        %v433 = vld [vmem:[%s368 + $0x100] sm:$0xff]
        %v434 = vld [vmem:[%s368 + $0x108] sm:$0xff]
        %v435 = vld [vmem:[%s368 + $0x110] sm:$0xff]
        %v436 = vld [vmem:[%s368 + $0x118] sm:$0xff]
        %v437 = vld [vmem:[%s368 + $0x120] sm:$0xff]
        %v438 = vld [vmem:[%s368 + $0x128] sm:$0xff]
        %v439 = vld [vmem:[%s368 + $0x130] sm:$0xff]
        %v440 = vld [vmem:[%s368 + $0x138] sm:$0xff]
        %v441 = vld [vmem:[%s368 + $0x140] sm:$0xff]
        %v442 = vld [vmem:[%s368 + $0x148] sm:$0xff]
        %v443 = vld [vmem:[%s368 + $0x150] sm:$0xff]
        %v444 = vld [vmem:[%s368 + $0x158] sm:$0xff]
        %v445 = vld [vmem:[%s368 + $0x160] sm:$0xff]
        %v446 = vld [vmem:[%s368 + $0x168] sm:$0xff]
        %v447 = vld [vmem:[%s368 + $0x170] sm:$0xff]
        %v448 = vld [vmem:[%s368 + $0x178] sm:$0xff]
        %v449 = vld [vmem:[%s368 + $0x180] sm:$0xff]
        %v450 = vld [vmem:[%s368 + $0x188] sm:$0xff]
        %v451 = vld [vmem:[%s368 + $0x190] sm:$0xff]
        %v452 = vld [vmem:[%s368 + $0x198] sm:$0xff]
        %v453 = vld [vmem:[%s368 + $0x1a0] sm:$0xff]
        %v454 = vld [vmem:[%s368 + $0x1a8] sm:$0xff]
        %v455 = vld [vmem:[%s368 + $0x1b0] sm:$0xff]
        %v456 = vld [vmem:[%s368 + $0x1b8] sm:$0xff]
        %v457 = vld [vmem:[%s368 + $0x1c0] sm:$0xff]
        %v458 = vld [vmem:[%s368 + $0x1c8] sm:$0xff]
        %v459 = vld [vmem:[%s368 + $0x1d0] sm:$0xff]
        %v460 = vld [vmem:[%s368 + $0x1d8] sm:$0xff]
        %v461 = vld [vmem:[%s368 + $0x1e0] sm:$0xff]
        %v462 = vld [vmem:[%s368 + $0x1e8] sm:$0xff]
        %v463 = vld [vmem:[%s368 + $0x1f0] sm:$0xff]
        %v464 = vld [vmem:[%s368 + $0x1f8] sm:$0xff]
        %465 = vmatprep.subr.mxu0 0.0
        %466 = vmatpush1.msra.mxu0 %v401
        %467 = vmatprep.subr.mxu0 0.0
        %468 = vmatpush1.msra.mxu0 %v402
        %469 = vmatprep.subr.mxu0 0.0
        %470 = vmatpush1.msra.mxu0 %v403
        %471 = vmatprep.subr.mxu0 0.0
        %472 = vmatpush1.msra.mxu0 %v404
        %473 = vmatprep.subr.mxu0 0.0
        %474 = vmatpush1.msra.mxu0 %v405
        %475 = vmatprep.subr.mxu0 0.0
        %476 = vmatpush1.msra.mxu0 %v406
        %477 = vmatprep.subr.mxu0 0.0
        %478 = vmatpush1.msra.mxu0 %v407
        %479 = vmatprep.subr.mxu0 0.0
        %480 = vmatpush1.msra.mxu0 %v408
        %481 = vmatprep.subr.mxu0 0.0
        %482 = vmatpush1.msra.mxu0 %v409
        %483 = vmatprep.subr.mxu0 0.0
        %484 = vmatpush1.msra.mxu0 %v410
        %485 = vmatprep.subr.mxu0 0.0
        %486 = vmatpush1.msra.mxu0 %v411
        %487 = vmatprep.subr.mxu0 0.0
        %488 = vmatpush1.msra.mxu0 %v412
        %489 = vmatprep.subr.mxu0 0.0
        %490 = vmatpush1.msra.mxu0 %v413
        %491 = vmatprep.subr.mxu0 0.0
        %492 = vmatpush1.msra.mxu0 %v414
        %493 = vmatprep.subr.mxu0 0.0
        %494 = vmatpush1.msra.mxu0 %v415
        %495 = vmatprep.subr.mxu0 0.0
        %496 = vmatpush1.msra.mxu0 %v416
        %497 = vmatprep.subr.mxu0 0.0
        %498 = vmatpush1.msra.mxu0 %v417
        %499 = vmatprep.subr.mxu0 0.0
        %500 = vmatpush1.msra.mxu0 %v418
        %501 = vmatprep.subr.mxu0 0.0
        %502 = vmatpush1.msra.mxu0 %v419
        %503 = vmatprep.subr.mxu0 0.0
        %504 = vmatpush1.msra.mxu0 %v420
        %505 = vmatprep.subr.mxu0 0.0
        %506 = vmatpush1.msra.mxu0 %v421
        %507 = vmatprep.subr.mxu0 0.0
        %508 = vmatpush1.msra.mxu0 %v422
        %509 = vmatprep.subr.mxu0 0.0
        %510 = vmatpush1.msra.mxu0 %v423
        %511 = vmatprep.subr.mxu0 0.0
        %512 = vmatpush1.msra.mxu0 %v424
        %513 = vmatprep.subr.mxu0 0.0
        %514 = vmatpush1.msra.mxu0 %v425
        %515 = vmatprep.subr.mxu0 0.0
        %516 = vmatpush1.msra.mxu0 %v426
        %517 = vmatprep.subr.mxu0 0.0
        %518 = vmatpush1.msra.mxu0 %v427
        %519 = vmatprep.subr.mxu0 0.0
        %520 = vmatpush1.msra.mxu0 %v428
        %521 = vmatprep.subr.mxu0 0.0
        %522 = vmatpush1.msra.mxu0 %v429
        %523 = vmatprep.subr.mxu0 0.0
        %524 = vmatpush1.msra.mxu0 %v430
        %525 = vmatprep.subr.mxu0 0.0
        %526 = vmatpush1.msra.mxu0 %v431
        %527 = vmatprep.subr.mxu0 0.0
        %528 = vmatpush1.msra.mxu0 %v432
        %529 = vmatprep.mubr.f32.mxu0 %v398
        %530 = vmatmul.mubr.f32.gmra.mrb[0].mxu0 %v397
        %v531 = vpop.f32.mrb[0].mxu0
        %v532 = vadd.f32 0.0, %v531
        %v533 = vpop.f32.mrb[0].mxu0
        %534 = vdwg.mxu0
        %535 = vmatprep.subr.mxu0 0.0
        %536 = vmatpush1.msra.mxu0 %v433
        %537 = vmatprep.subr.mxu0 0.0
        %538 = vmatpush1.msra.mxu0 %v434
        %539 = vmatprep.subr.mxu0 0.0
        %540 = vmatpush1.msra.mxu0 %v435
        %541 = vmatprep.subr.mxu0 0.0
        %542 = vmatpush1.msra.mxu0 %v436
        %543 = vmatprep.subr.mxu0 0.0
        %544 = vmatpush1.msra.mxu0 %v437
        %545 = vmatprep.subr.mxu0 0.0
        %546 = vmatpush1.msra.mxu0 %v438
        %547 = vmatprep.subr.mxu0 0.0
        %548 = vmatpush1.msra.mxu0 %v439
        %549 = vmatprep.subr.mxu0 0.0
        %550 = vmatpush1.msra.mxu0 %v440
        %551 = vmatprep.subr.mxu0 0.0
        %552 = vmatpush1.msra.mxu0 %v441
        %553 = vmatprep.subr.mxu0 0.0
        %554 = vmatpush1.msra.mxu0 %v442
        %555 = vmatprep.subr.mxu0 0.0
        %556 = vmatpush1.msra.mxu0 %v443
        %557 = vmatprep.subr.mxu0 0.0
        %558 = vmatpush1.msra.mxu0 %v444
        %559 = vmatprep.subr.mxu0 0.0
        %560 = vmatpush1.msra.mxu0 %v445
        %561 = vmatprep.subr.mxu0 0.0
        %562 = vmatpush1.msra.mxu0 %v446
        %563 = vmatprep.subr.mxu0 0.0
        %564 = vmatpush1.msra.mxu0 %v447
        %565 = vmatprep.subr.mxu0 0.0
        %566 = vmatpush1.msra.mxu0 %v448
        %567 = vmatprep.subr.mxu0 0.0
        %568 = vmatpush1.msra.mxu0 %v449
        %569 = vmatprep.subr.mxu0 0.0
        %570 = vmatpush1.msra.mxu0 %v450
        %571 = vmatprep.subr.mxu0 0.0
        %572 = vmatpush1.msra.mxu0 %v451
        %573 = vmatprep.subr.mxu0 0.0
        %574 = vmatpush1.msra.mxu0 %v452
        %575 = vmatprep.subr.mxu0 0.0
        %576 = vmatpush1.msra.mxu0 %v453
        %577 = vmatprep.subr.mxu0 0.0
        %578 = vmatpush1.msra.mxu0 %v454
        %579 = vmatprep.subr.mxu0 0.0
        %580 = vmatpush1.msra.mxu0 %v455
        %581 = vmatprep.subr.mxu0 0.0
        %582 = vmatpush1.msra.mxu0 %v456
        %583 = vmatprep.subr.mxu0 0.0
        %584 = vmatpush1.msra.mxu0 %v457
        %585 = vmatprep.subr.mxu0 0.0
        %586 = vmatpush1.msra.mxu0 %v458
        %587 = vmatprep.subr.mxu0 0.0
        %588 = vmatpush1.msra.mxu0 %v459
        %589 = vmatprep.subr.mxu0 0.0
        %590 = vmatpush1.msra.mxu0 %v460
        %591 = vmatprep.subr.mxu0 0.0
        %592 = vmatpush1.msra.mxu0 %v461
        %593 = vmatprep.subr.mxu0 0.0
        %594 = vmatpush1.msra.mxu0 %v462
        %595 = vmatprep.subr.mxu0 0.0
        %596 = vmatpush1.msra.mxu0 %v463
        %597 = vmatprep.subr.mxu0 0.0
        %598 = vmatpush1.msra.mxu0 %v464
        %599 = vmatprep.mubr.f32.mxu0 %v400
        %600 = vmatmul.mubr.f32.gmra.mrb[0].mxu0 %v399
        %v601 = vpop.f32.mrb[0].mxu0
        %v602 = vadd.f32 %v532, %v601
        %v603 = vpop.f32.mrb[0].mxu0
        %604 = vdwg.mxu0
        %v605 = vld [vmem:[%s373] sm:$0xff]
        %v606 = vld [vmem:[%s373 + $0x8] sm:$0xff]
        %v607 = vld [vmem:[%s373 + $0x10] sm:$0xff]
        %v608 = vld [vmem:[%s373 + $0x18] sm:$0xff]
        %v609 = vld [vmem:[%s373 + $0x20] sm:$0xff]
        %v610 = vld [vmem:[%s373 + $0x28] sm:$0xff]
        %v611 = vld [vmem:[%s373 + $0x30] sm:$0xff]
        %v612 = vld [vmem:[%s373 + $0x38] sm:$0xff]
        %v613 = vld [vmem:[%s373 + $0x40] sm:$0xff]
        %v614 = vld [vmem:[%s373 + $0x48] sm:$0xff]
        %v615 = vld [vmem:[%s373 + $0x50] sm:$0xff]
        %v616 = vld [vmem:[%s373 + $0x58] sm:$0xff]
        %v617 = vld [vmem:[%s373 + $0x60] sm:$0xff]
        %v618 = vld [vmem:[%s373 + $0x68] sm:$0xff]
        %v619 = vld [vmem:[%s373 + $0x70] sm:$0xff]
        %v620 = vld [vmem:[%s373 + $0x78] sm:$0xff]
        %v621 = vld [vmem:[%s373 + $0x80] sm:$0xff]
        %v622 = vld [vmem:[%s373 + $0x88] sm:$0xff]
        %v623 = vld [vmem:[%s373 + $0x90] sm:$0xff]
        %v624 = vld [vmem:[%s373 + $0x98] sm:$0xff]
        %v625 = vld [vmem:[%s373 + $0xa0] sm:$0xff]
        %v626 = vld [vmem:[%s373 + $0xa8] sm:$0xff]
        %v627 = vld [vmem:[%s373 + $0xb0] sm:$0xff]
        %v628 = vld [vmem:[%s373 + $0xb8] sm:$0xff]
        %v629 = vld [vmem:[%s373 + $0xc0] sm:$0xff]
        %v630 = vld [vmem:[%s373 + $0xc8] sm:$0xff]
        %v631 = vld [vmem:[%s373 + $0xd0] sm:$0xff]
        %v632 = vld [vmem:[%s373 + $0xd8] sm:$0xff]
        %v633 = vld [vmem:[%s373 + $0xe0] sm:$0xff]
        %v634 = vld [vmem:[%s373 + $0xe8] sm:$0xff]
        %v635 = vld [vmem:[%s373 + $0xf0] sm:$0xff]
        %v636 = vld [vmem:[%s373 + $0xf8] sm:$0xff]
        %v637 = vld [vmem:[%s373 + $0x100] sm:$0xff]
        %v638 = vld [vmem:[%s373 + $0x108] sm:$0xff]
        %v639 = vld [vmem:[%s373 + $0x110] sm:$0xff]
        %v640 = vld [vmem:[%s373 + $0x118] sm:$0xff]
        %v641 = vld [vmem:[%s373 + $0x120] sm:$0xff]
        %v642 = vld [vmem:[%s373 + $0x128] sm:$0xff]
        %v643 = vld [vmem:[%s373 + $0x130] sm:$0xff]
        %v644 = vld [vmem:[%s373 + $0x138] sm:$0xff]
        %v645 = vld [vmem:[%s373 + $0x140] sm:$0xff]
        %v646 = vld [vmem:[%s373 + $0x148] sm:$0xff]
        %v647 = vld [vmem:[%s373 + $0x150] sm:$0xff]
        %v648 = vld [vmem:[%s373 + $0x158] sm:$0xff]
        %v649 = vld [vmem:[%s373 + $0x160] sm:$0xff]
        %v650 = vld [vmem:[%s373 + $0x168] sm:$0xff]
        %v651 = vld [vmem:[%s373 + $0x170] sm:$0xff]
        %v652 = vld [vmem:[%s373 + $0x178] sm:$0xff]
        %v653 = vld [vmem:[%s373 + $0x180] sm:$0xff]
        %v654 = vld [vmem:[%s373 + $0x188] sm:$0xff]
        %v655 = vld [vmem:[%s373 + $0x190] sm:$0xff]
        %v656 = vld [vmem:[%s373 + $0x198] sm:$0xff]
        %v657 = vld [vmem:[%s373 + $0x1a0] sm:$0xff]
        %v658 = vld [vmem:[%s373 + $0x1a8] sm:$0xff]
        %v659 = vld [vmem:[%s373 + $0x1b0] sm:$0xff]
        %v660 = vld [vmem:[%s373 + $0x1b8] sm:$0xff]
        %v661 = vld [vmem:[%s373 + $0x1c0] sm:$0xff]
        %v662 = vld [vmem:[%s373 + $0x1c8] sm:$0xff]
        %v663 = vld [vmem:[%s373 + $0x1d0] sm:$0xff]
        %v664 = vld [vmem:[%s373 + $0x1d8] sm:$0xff]
        %v665 = vld [vmem:[%s373 + $0x1e0] sm:$0xff]
        %v666 = vld [vmem:[%s373 + $0x1e8] sm:$0xff]
        %v667 = vld [vmem:[%s373 + $0x1f0] sm:$0xff]
        %v668 = vld [vmem:[%s373 + $0x1f8] sm:$0xff]
        %669 = vmatprep.subr.mxu0 0.0
        %670 = vmatpush1.msra.mxu0 %v605
        %671 = vmatprep.subr.mxu0 0.0
        %672 = vmatpush1.msra.mxu0 %v606
        %673 = vmatprep.subr.mxu0 0.0
        %674 = vmatpush1.msra.mxu0 %v607
        %675 = vmatprep.subr.mxu0 0.0
        %676 = vmatpush1.msra.mxu0 %v608
        %677 = vmatprep.subr.mxu0 0.0
        %678 = vmatpush1.msra.mxu0 %v609
        %679 = vmatprep.subr.mxu0 0.0
        %680 = vmatpush1.msra.mxu0 %v610
        %681 = vmatprep.subr.mxu0 0.0
        %682 = vmatpush1.msra.mxu0 %v611
        %683 = vmatprep.subr.mxu0 0.0
        %684 = vmatpush1.msra.mxu0 %v612
        %685 = vmatprep.subr.mxu0 0.0
        %686 = vmatpush1.msra.mxu0 %v613
        %687 = vmatprep.subr.mxu0 0.0
        %688 = vmatpush1.msra.mxu0 %v614
        %689 = vmatprep.subr.mxu0 0.0
        %690 = vmatpush1.msra.mxu0 %v615
        %691 = vmatprep.subr.mxu0 0.0
        %692 = vmatpush1.msra.mxu0 %v616
        %693 = vmatprep.subr.mxu0 0.0
        %694 = vmatpush1.msra.mxu0 %v617
        %695 = vmatprep.subr.mxu0 0.0
        %696 = vmatpush1.msra.mxu0 %v618
        %697 = vmatprep.subr.mxu0 0.0
        %698 = vmatpush1.msra.mxu0 %v619
        %699 = vmatprep.subr.mxu0 0.0
        %700 = vmatpush1.msra.mxu0 %v620
        %701 = vmatprep.subr.mxu0 0.0
        %702 = vmatpush1.msra.mxu0 %v621
        %703 = vmatprep.subr.mxu0 0.0
        %704 = vmatpush1.msra.mxu0 %v622
        %705 = vmatprep.subr.mxu0 0.0
        %706 = vmatpush1.msra.mxu0 %v623
        %707 = vmatprep.subr.mxu0 0.0
        %708 = vmatpush1.msra.mxu0 %v624
        %709 = vmatprep.subr.mxu0 0.0
        %710 = vmatpush1.msra.mxu0 %v625
        %711 = vmatprep.subr.mxu0 0.0
        %712 = vmatpush1.msra.mxu0 %v626
        %713 = vmatprep.subr.mxu0 0.0
        %714 = vmatpush1.msra.mxu0 %v627
        %715 = vmatprep.subr.mxu0 0.0
        %716 = vmatpush1.msra.mxu0 %v628
        %717 = vmatprep.subr.mxu0 0.0
        %718 = vmatpush1.msra.mxu0 %v629
        %719 = vmatprep.subr.mxu0 0.0
        %720 = vmatpush1.msra.mxu0 %v630
        %721 = vmatprep.subr.mxu0 0.0
        %722 = vmatpush1.msra.mxu0 %v631
        %723 = vmatprep.subr.mxu0 0.0
        %724 = vmatpush1.msra.mxu0 %v632
        %725 = vmatprep.subr.mxu0 0.0
        %726 = vmatpush1.msra.mxu0 %v633
        %727 = vmatprep.subr.mxu0 0.0
        %728 = vmatpush1.msra.mxu0 %v634
        %729 = vmatprep.subr.mxu0 0.0
        %730 = vmatpush1.msra.mxu0 %v635
        %731 = vmatprep.subr.mxu0 0.0
        %732 = vmatpush1.msra.mxu0 %v636
        %733 = vmatprep.mubr.f32.mxu0 %v398
        %734 = vmatmul.mubr.f32.gmra.mrb[0].mxu0 %v397
        %v735 = vpop.f32.mrb[0].mxu0
        %v736 = vadd.f32 0.0, %v735
        %v737 = vpop.f32.mrb[0].mxu0
        %738 = vdwg.mxu0
        %739 = vmatprep.subr.mxu0 0.0
        %740 = vmatpush1.msra.mxu0 %v637
        %741 = vmatprep.subr.mxu0 0.0
        %742 = vmatpush1.msra.mxu0 %v638
        %743 = vmatprep.subr.mxu0 0.0
        %744 = vmatpush1.msra.mxu0 %v639
        %745 = vmatprep.subr.mxu0 0.0
        %746 = vmatpush1.msra.mxu0 %v640
        %747 = vmatprep.subr.mxu0 0.0
        %748 = vmatpush1.msra.mxu0 %v641
        %749 = vmatprep.subr.mxu0 0.0
        %750 = vmatpush1.msra.mxu0 %v642
        %751 = vmatprep.subr.mxu0 0.0
        %752 = vmatpush1.msra.mxu0 %v643
        %753 = vmatprep.subr.mxu0 0.0
        %754 = vmatpush1.msra.mxu0 %v644
        %755 = vmatprep.subr.mxu0 0.0
        %756 = vmatpush1.msra.mxu0 %v645
        %757 = vmatprep.subr.mxu0 0.0
        %758 = vmatpush1.msra.mxu0 %v646
        %759 = vmatprep.subr.mxu0 0.0
        %760 = vmatpush1.msra.mxu0 %v647
        %761 = vmatprep.subr.mxu0 0.0
        %762 = vmatpush1.msra.mxu0 %v648
        %763 = vmatprep.subr.mxu0 0.0
        %764 = vmatpush1.msra.mxu0 %v649
        %765 = vmatprep.subr.mxu0 0.0
        %766 = vmatpush1.msra.mxu0 %v650
        %767 = vmatprep.subr.mxu0 0.0
        %768 = vmatpush1.msra.mxu0 %v651
        %769 = vmatprep.subr.mxu0 0.0
        %770 = vmatpush1.msra.mxu0 %v652
        %771 = vmatprep.subr.mxu0 0.0
        %772 = vmatpush1.msra.mxu0 %v653
        %773 = vmatprep.subr.mxu0 0.0
        %774 = vmatpush1.msra.mxu0 %v654
        %775 = vmatprep.subr.mxu0 0.0
        %776 = vmatpush1.msra.mxu0 %v655
        %777 = vmatprep.subr.mxu0 0.0
        %778 = vmatpush1.msra.mxu0 %v656
        %779 = vmatprep.subr.mxu0 0.0
        %780 = vmatpush1.msra.mxu0 %v657
        %781 = vmatprep.subr.mxu0 0.0
        %782 = vmatpush1.msra.mxu0 %v658
        %783 = vmatprep.subr.mxu0 0.0
        %784 = vmatpush1.msra.mxu0 %v659
        %785 = vmatprep.subr.mxu0 0.0
        %786 = vmatpush1.msra.mxu0 %v660
        %787 = vmatprep.subr.mxu0 0.0
        %788 = vmatpush1.msra.mxu0 %v661
        %789 = vmatprep.subr.mxu0 0.0
        %790 = vmatpush1.msra.mxu0 %v662
        %791 = vmatprep.subr.mxu0 0.0
        %792 = vmatpush1.msra.mxu0 %v663
        %793 = vmatprep.subr.mxu0 0.0
        %794 = vmatpush1.msra.mxu0 %v664
        %795 = vmatprep.subr.mxu0 0.0
        %796 = vmatpush1.msra.mxu0 %v665
        %797 = vmatprep.subr.mxu0 0.0
        %798 = vmatpush1.msra.mxu0 %v666
        %799 = vmatprep.subr.mxu0 0.0
        %800 = vmatpush1.msra.mxu0 %v667
        %801 = vmatprep.subr.mxu0 0.0
        %802 = vmatpush1.msra.mxu0 %v668
        %803 = vmatprep.mubr.f32.mxu0 %v400
        %804 = vmatmul.mubr.f32.gmra.mrb[0].mxu0 %v399
        %v805 = vpop.f32.mrb[0].mxu0
        %v806 = vadd.f32 %v736, %v805
        %v807 = vpop.f32.mrb[0].mxu0
        %808 = vdwg.mxu0
        %v809 = vld [vmem:[%s378] sm:$0xff]
        %v810 = vld [vmem:[%s378 + $0x8] sm:$0xff]
        %v811 = vld [vmem:[%s378 + $0x10] sm:$0xff]
        %v812 = vld [vmem:[%s378 + $0x18] sm:$0xff]
        %v813 = vld [vmem:[%s378 + $0x20] sm:$0xff]
        %v814 = vld [vmem:[%s378 + $0x28] sm:$0xff]
        %v815 = vld [vmem:[%s378 + $0x30] sm:$0xff]
        %v816 = vld [vmem:[%s378 + $0x38] sm:$0xff]
        %v817 = vld [vmem:[%s378 + $0x40] sm:$0xff]
        %v818 = vld [vmem:[%s378 + $0x48] sm:$0xff]
        %v819 = vld [vmem:[%s378 + $0x50] sm:$0xff]
        %v820 = vld [vmem:[%s378 + $0x58] sm:$0xff]
        %v821 = vld [vmem:[%s378 + $0x60] sm:$0xff]
        %v822 = vld [vmem:[%s378 + $0x68] sm:$0xff]
        %v823 = vld [vmem:[%s378 + $0x70] sm:$0xff]
        %v824 = vld [vmem:[%s378 + $0x78] sm:$0xff]
        %v825 = vld [vmem:[%s378 + $0x80] sm:$0xff]
        %v826 = vld [vmem:[%s378 + $0x88] sm:$0xff]
        %v827 = vld [vmem:[%s378 + $0x90] sm:$0xff]
        %v828 = vld [vmem:[%s378 + $0x98] sm:$0xff]
        %v829 = vld [vmem:[%s378 + $0xa0] sm:$0xff]
        %v830 = vld [vmem:[%s378 + $0xa8] sm:$0xff]
        %v831 = vld [vmem:[%s378 + $0xb0] sm:$0xff]
        %v832 = vld [vmem:[%s378 + $0xb8] sm:$0xff]
        %v833 = vld [vmem:[%s378 + $0xc0] sm:$0xff]
        %v834 = vld [vmem:[%s378 + $0xc8] sm:$0xff]
        %v835 = vld [vmem:[%s378 + $0xd0] sm:$0xff]
        %v836 = vld [vmem:[%s378 + $0xd8] sm:$0xff]
        %v837 = vld [vmem:[%s378 + $0xe0] sm:$0xff]
        %v838 = vld [vmem:[%s378 + $0xe8] sm:$0xff]
        %v839 = vld [vmem:[%s378 + $0xf0] sm:$0xff]
        %v840 = vld [vmem:[%s378 + $0xf8] sm:$0xff]
        %v841 = vld [vmem:[%s378 + $0x100] sm:$0xff]
        %v842 = vld [vmem:[%s378 + $0x108] sm:$0xff]
        %v843 = vld [vmem:[%s378 + $0x110] sm:$0xff]
        %v844 = vld [vmem:[%s378 + $0x118] sm:$0xff]
        %v845 = vld [vmem:[%s378 + $0x120] sm:$0xff]
        %v846 = vld [vmem:[%s378 + $0x128] sm:$0xff]
        %v847 = vld [vmem:[%s378 + $0x130] sm:$0xff]
        %v848 = vld [vmem:[%s378 + $0x138] sm:$0xff]
        %v849 = vld [vmem:[%s378 + $0x140] sm:$0xff]
        %v850 = vld [vmem:[%s378 + $0x148] sm:$0xff]
        %v851 = vld [vmem:[%s378 + $0x150] sm:$0xff]
        %v852 = vld [vmem:[%s378 + $0x158] sm:$0xff]
        %v853 = vld [vmem:[%s378 + $0x160] sm:$0xff]
        %v854 = vld [vmem:[%s378 + $0x168] sm:$0xff]
        %v855 = vld [vmem:[%s378 + $0x170] sm:$0xff]
        %v856 = vld [vmem:[%s378 + $0x178] sm:$0xff]
        %v857 = vld [vmem:[%s378 + $0x180] sm:$0xff]
        %v858 = vld [vmem:[%s378 + $0x188] sm:$0xff]
        %v859 = vld [vmem:[%s378 + $0x190] sm:$0xff]
        %v860 = vld [vmem:[%s378 + $0x198] sm:$0xff]
        %v861 = vld [vmem:[%s378 + $0x1a0] sm:$0xff]
        %v862 = vld [vmem:[%s378 + $0x1a8] sm:$0xff]
        %v863 = vld [vmem:[%s378 + $0x1b0] sm:$0xff]
        %v864 = vld [vmem:[%s378 + $0x1b8] sm:$0xff]
        %v865 = vld [vmem:[%s378 + $0x1c0] sm:$0xff]
        %v866 = vld [vmem:[%s378 + $0x1c8] sm:$0xff]
        %v867 = vld [vmem:[%s378 + $0x1d0] sm:$0xff]
        %v868 = vld [vmem:[%s378 + $0x1d8] sm:$0xff]
        %v869 = vld [vmem:[%s378 + $0x1e0] sm:$0xff]
        %v870 = vld [vmem:[%s378 + $0x1e8] sm:$0xff]
        %v871 = vld [vmem:[%s378 + $0x1f0] sm:$0xff]
        %v872 = vld [vmem:[%s378 + $0x1f8] sm:$0xff]
        %873 = vmatprep.subr.mxu0 0.0
        %874 = vmatpush1.msra.mxu0 %v809
        %875 = vmatprep.subr.mxu0 0.0
        %876 = vmatpush1.msra.mxu0 %v810
        %877 = vmatprep.subr.mxu0 0.0
        %878 = vmatpush1.msra.mxu0 %v811
        %879 = vmatprep.subr.mxu0 0.0
        %880 = vmatpush1.msra.mxu0 %v812
        %881 = vmatprep.subr.mxu0 0.0
        %882 = vmatpush1.msra.mxu0 %v813
        %883 = vmatprep.subr.mxu0 0.0
        %884 = vmatpush1.msra.mxu0 %v814
        %885 = vmatprep.subr.mxu0 0.0
        %886 = vmatpush1.msra.mxu0 %v815
        %887 = vmatprep.subr.mxu0 0.0
        %888 = vmatpush1.msra.mxu0 %v816
        %889 = vmatprep.subr.mxu0 0.0
        %890 = vmatpush1.msra.mxu0 %v817
        %891 = vmatprep.subr.mxu0 0.0
        %892 = vmatpush1.msra.mxu0 %v818
        %893 = vmatprep.subr.mxu0 0.0
        %894 = vmatpush1.msra.mxu0 %v819
        %895 = vmatprep.subr.mxu0 0.0
        %896 = vmatpush1.msra.mxu0 %v820
        %897 = vmatprep.subr.mxu0 0.0
        %898 = vmatpush1.msra.mxu0 %v821
        %899 = vmatprep.subr.mxu0 0.0
        %900 = vmatpush1.msra.mxu0 %v822
        %901 = vmatprep.subr.mxu0 0.0
        %902 = vmatpush1.msra.mxu0 %v823
        %903 = vmatprep.subr.mxu0 0.0
        %904 = vmatpush1.msra.mxu0 %v824
        %905 = vmatprep.subr.mxu0 0.0
        %906 = vmatpush1.msra.mxu0 %v825
        %907 = vmatprep.subr.mxu0 0.0
        %908 = vmatpush1.msra.mxu0 %v826
        %909 = vmatprep.subr.mxu0 0.0
        %910 = vmatpush1.msra.mxu0 %v827
        %911 = vmatprep.subr.mxu0 0.0
        %912 = vmatpush1.msra.mxu0 %v828
        %913 = vmatprep.subr.mxu0 0.0
        %914 = vmatpush1.msra.mxu0 %v829
        %915 = vmatprep.subr.mxu0 0.0
        %916 = vmatpush1.msra.mxu0 %v830
        %917 = vmatprep.subr.mxu0 0.0
        %918 = vmatpush1.msra.mxu0 %v831
        %919 = vmatprep.subr.mxu0 0.0
        %920 = vmatpush1.msra.mxu0 %v832
        %921 = vmatprep.subr.mxu0 0.0
        %922 = vmatpush1.msra.mxu0 %v833
        %923 = vmatprep.subr.mxu0 0.0
        %924 = vmatpush1.msra.mxu0 %v834
        %925 = vmatprep.subr.mxu0 0.0
        %926 = vmatpush1.msra.mxu0 %v835
        %927 = vmatprep.subr.mxu0 0.0
        %928 = vmatpush1.msra.mxu0 %v836
        %929 = vmatprep.subr.mxu0 0.0
        %930 = vmatpush1.msra.mxu0 %v837
        %931 = vmatprep.subr.mxu0 0.0
        %932 = vmatpush1.msra.mxu0 %v838
        %933 = vmatprep.subr.mxu0 0.0
        %934 = vmatpush1.msra.mxu0 %v839
        %935 = vmatprep.subr.mxu0 0.0
        %936 = vmatpush1.msra.mxu0 %v840
        %937 = vmatprep.mubr.f32.mxu0 %v398
        %938 = vmatmul.mubr.f32.gmra.mrb[0].mxu0 %v397
        %v939 = vpop.f32.mrb[0].mxu0
        %v940 = vadd.f32 0.0, %v939
        %v941 = vpop.f32.mrb[0].mxu0
        %942 = vdwg.mxu0
        %943 = vmatprep.subr.mxu0 0.0
        %944 = vmatpush1.msra.mxu0 %v841
        %945 = vmatprep.subr.mxu0 0.0
        %946 = vmatpush1.msra.mxu0 %v842
        %947 = vmatprep.subr.mxu0 0.0
        %948 = vmatpush1.msra.mxu0 %v843
        %949 = vmatprep.subr.mxu0 0.0
        %950 = vmatpush1.msra.mxu0 %v844
        %951 = vmatprep.subr.mxu0 0.0
        %952 = vmatpush1.msra.mxu0 %v845
        %953 = vmatprep.subr.mxu0 0.0
        %954 = vmatpush1.msra.mxu0 %v846
        %955 = vmatprep.subr.mxu0 0.0
        %956 = vmatpush1.msra.mxu0 %v847
        %957 = vmatprep.subr.mxu0 0.0
        %958 = vmatpush1.msra.mxu0 %v848
        %959 = vmatprep.subr.mxu0 0.0
        %960 = vmatpush1.msra.mxu0 %v849
        %961 = vmatprep.subr.mxu0 0.0
        %962 = vmatpush1.msra.mxu0 %v850
        %963 = vmatprep.subr.mxu0 0.0
        %964 = vmatpush1.msra.mxu0 %v851
        %965 = vmatprep.subr.mxu0 0.0
        %966 = vmatpush1.msra.mxu0 %v852
        %967 = vmatprep.subr.mxu0 0.0
        %968 = vmatpush1.msra.mxu0 %v853
        %969 = vmatprep.subr.mxu0 0.0
        %970 = vmatpush1.msra.mxu0 %v854
        %971 = vmatprep.subr.mxu0 0.0
        %972 = vmatpush1.msra.mxu0 %v855
        %973 = vmatprep.subr.mxu0 0.0
        %974 = vmatpush1.msra.mxu0 %v856
        %975 = vmatprep.subr.mxu0 0.0
        %976 = vmatpush1.msra.mxu0 %v857
        %977 = vmatprep.subr.mxu0 0.0
        %978 = vmatpush1.msra.mxu0 %v858
        %979 = vmatprep.subr.mxu0 0.0
        %980 = vmatpush1.msra.mxu0 %v859
        %981 = vmatprep.subr.mxu0 0.0
        %982 = vmatpush1.msra.mxu0 %v860
        %983 = vmatprep.subr.mxu0 0.0
        %984 = vmatpush1.msra.mxu0 %v861
        %985 = vmatprep.subr.mxu0 0.0
        %986 = vmatpush1.msra.mxu0 %v862
        %987 = vmatprep.subr.mxu0 0.0
        %988 = vmatpush1.msra.mxu0 %v863
        %989 = vmatprep.subr.mxu0 0.0
        %990 = vmatpush1.msra.mxu0 %v864
        %991 = vmatprep.subr.mxu0 0.0
        %992 = vmatpush1.msra.mxu0 %v865
        %993 = vmatprep.subr.mxu0 0.0
        %994 = vmatpush1.msra.mxu0 %v866
        %995 = vmatprep.subr.mxu0 0.0
        %996 = vmatpush1.msra.mxu0 %v867
        %997 = vmatprep.subr.mxu0 0.0
        %998 = vmatpush1.msra.mxu0 %v868
        %999 = vmatprep.subr.mxu0 0.0
        %1000 = vmatpush1.msra.mxu0 %v869
        %1001 = vmatprep.subr.mxu0 0.0
        %1002 = vmatpush1.msra.mxu0 %v870
        %1003 = vmatprep.subr.mxu0 0.0
        %1004 = vmatpush1.msra.mxu0 %v871
        %1005 = vmatprep.subr.mxu0 0.0
        %1006 = vmatpush1.msra.mxu0 %v872
        %1007 = vmatprep.mubr.f32.mxu0 %v400
        %1008 = vmatmul.mubr.f32.gmra.mrb[0].mxu0 %v399
        %v1009 = vpop.f32.mrb[0].mxu0
        %v1010 = vadd.f32 %v940, %v1009
        %v1011 = vpop.f32.mrb[0].mxu0
        %1012 = vdwg.mxu0
        %vm1013 = vcmask 523264
        %v1015 = vsel %vm1013, %v602, 0
        %v1018 = vsel %vm1013, %v806, 0
        %1020 = vmatprep.subr.mxu0 0.0
        %1021 = vmatpush1.xpose.msra.mxu0 %v1018
        %1022 = vmatprep.subr.mxu0 0.0
        %1023 = vmatpush1.xpose.msra.mxu0 0.0
        %1024 = vmatprep.subr.mxu0 0.0
        %1025 = vmatpush1.xpose.msra.mxu0 0.0
        %1026 = vmatprep.subr.mxu0 0.0
        %1027 = vmatpush1.xpose.msra.mxu0 0.0
        %1028 = vmatprep.subr.mxu0 0.0
        %1029 = vmatpush1.xpose.msra.mxu0 0.0
        %1030 = vmatprep.subr.mxu0 0.0
        %1031 = vmatpush1.xpose.msra.mxu0 0.0
        %1032 = vmatprep.subr.mxu0 0.0
        %1033 = vmatpush1.xpose.msra.mxu0 0.0
        %1034 = vmatprep.subr.mxu0 0.0
        %1035 = vmatpush1.xpose.msra.mxu0 0.0
        %1036 = vmatprep.subr.mxu0 0.0
        %1037 = vmatpush1.xpose.msra.mxu0 0.0
        %1038 = vmatprep.subr.mxu0 0.0
        %1039 = vmatpush1.xpose.msra.mxu0 0.0
        %1040 = vmatprep.subr.mxu0 0.0
        %1041 = vmatpush1.xpose.msra.mxu0 0.0
        %1042 = vmatprep.subr.mxu0 0.0
        %1043 = vmatpush1.xpose.msra.mxu0 0.0
        %1044 = vmatprep.subr.mxu0 0.0
        %1045 = vmatpush1.xpose.msra.mxu0 0.0
        %1046 = vmatprep.subr.mxu0 0.0
        %1047 = vmatpush1.xpose.msra.mxu0 0.0
        %1048 = vmatprep.subr.mxu0 0.0
        %1049 = vmatpush1.xpose.msra.mxu0 0.0
        %1050 = vmatprep.subr.mxu0 0.0
        %1051 = vmatpush1.xpose.msra.mxu0 0.0
        %1052 = vmatprep.subr.mxu0 0.0
        %1053 = vmatpush1.xpose.msra.mxu0 0.0
        %1054 = vmatprep.subr.mxu0 0.0
        %1055 = vmatpush1.xpose.msra.mxu0 0.0
        %1056 = vmatprep.subr.mxu0 0.0
        %1057 = vmatpush1.xpose.msra.mxu0 0.0
        %1058 = vmatprep.subr.mxu0 0.0
        %1059 = vmatpush1.xpose.msra.mxu0 0.0
        %1060 = vmatprep.subr.mxu0 0.0
        %1061 = vmatpush1.xpose.msra.mxu0 0.0
        %1062 = vmatprep.subr.mxu0 0.0
        %1063 = vmatpush1.xpose.msra.mxu0 0.0
        %1064 = vmatprep.subr.mxu0 0.0
        %1065 = vmatpush1.xpose.msra.mxu0 0.0
        %1066 = vmatprep.subr.mxu0 0.0
        %1067 = vmatpush1.xpose.msra.mxu0 0.0
        %1068 = vmatprep.subr.mxu0 0.0
        %1069 = vmatpush1.xpose.msra.mxu0 0.0
        %1070 = vmatprep.subr.mxu0 0.0
        %1071 = vmatpush1.xpose.msra.mxu0 0.0
        %1072 = vmatprep.subr.mxu0 0.0
        %1073 = vmatpush1.xpose.msra.mxu0 0.0
        %1074 = vmatprep.subr.mxu0 0.0
        %1075 = vmatpush1.xpose.msra.mxu0 0.0
        %1076 = vmatprep.subr.mxu0 0.0
        %1077 = vmatpush1.xpose.msra.mxu0 0.0
        %1078 = vmatprep.subr.mxu0 0.0
        %1079 = vmatpush1.xpose.msra.mxu0 0.0
        %1080 = vmatprep.subr.mxu0 0.0
        %1081 = vmatpush1.xpose.msra.mxu0 0.0
        %1082 = vmatprep.subr.mxu0 0.0
        %1083 = vmatpush1.xpose.msra.mxu0 0.0
        %1084 = vmatprep.mubr.f32.mxu0 0.0
        %1085 = vmatmul.mubr.f32.gmra.mrb[0].mxu0 %v1015
        %v1086 = vpop.f32.mrb[0].mxu0
        %v1087 = vadd.f32 0.0, %v1086
        %v1088 = vpop.f32.mrb[0].mxu0
        %1089 = vdwg.mxu0
        %v1090 = vmul.f32 %v1087, 0.125
        %v1091 = vld [vmem:[%s383] sm:$0xff]
        %v1092 = vld [vmem:[%s383 + $0x8] sm:$0xff]
        %v1093 = vld [vmem:[%s383 + $0x10] sm:$0xff]
        %v1094 = vld [vmem:[%s383 + $0x18] sm:$0xff]
        %v1095 = vld [vmem:[%s383 + $0x20] sm:$0xff]
        %v1096 = vld [vmem:[%s383 + $0x28] sm:$0xff]
        %v1097 = vld [vmem:[%s383 + $0x30] sm:$0xff]
        %v1098 = vld [vmem:[%s383 + $0x38] sm:$0xff]
        %v1099 = vcombine.high %v602, %v602
        %v1101 = vunpack.c.l.s4 1966171168
        %v1102 = vunpack.c.0.s8 %v1101
        %v1103 = vlaneseq
        %v1104 = vshrl.u32 %v1103, 7
        %v1105 = vsub.s32 %v1102, %v1104
        %v1106 = vrot.slane %v602, %v1105
        %v1108 = vunpack.c.l.s4 1966171168
        %v1109 = vunpack.c.0.s8 %v1108
        %v1110 = vlaneseq
        %v1111 = vshrl.u32 %v1110, 7
        %v1112 = vsub.s32 %v1109, %v1111
        %v1113 = vrot.slane %v1099, %v1112
        %v1114 = vcombine.high %v1106, %v1106
        %v1115 = vcombine.high %v1113, %v1113
        %v1117 = vunpack.c.l.s4 1966171168
        %v1118 = vunpack.c.0.s8 %v1117
        %v1119 = vlaneseq
        %v1120 = vshrl.u32 %v1119, 7
        %v1121 = vsub.s32 %v1118, %v1120
        %v1122 = vrot.slane %v1106, %v1121
        %v1124 = vunpack.c.l.s4 1966171168
        %v1125 = vunpack.c.0.s8 %v1124
        %v1126 = vlaneseq
        %v1127 = vshrl.u32 %v1126, 7
        %v1128 = vsub.s32 %v1125, %v1127
        %v1129 = vrot.slane %v1113, %v1128
        %v1131 = vunpack.c.l.s4 1966171168
        %v1132 = vunpack.c.0.s8 %v1131
        %v1133 = vlaneseq
        %v1134 = vshrl.u32 %v1133, 7
        %v1135 = vsub.s32 %v1132, %v1134
        %v1136 = vrot.slane %v1114, %v1135
        %v1138 = vunpack.c.l.s4 1966171168
        %v1139 = vunpack.c.0.s8 %v1138
        %v1140 = vlaneseq
        %v1141 = vshrl.u32 %v1140, 7
        %v1142 = vsub.s32 %v1139, %v1141
        %v1143 = vrot.slane %v1115, %v1142
        %v1144 = vcombine.high %v1122, %v1122
        %v1145 = vcombine.high %v1129, %v1129
        %v1146 = vcombine.high %v1136, %v1136
        %v1147 = vcombine.high %v1143, %v1143
        %v1148 = vlaneseq
        %v1149 = vshrl.u32 %v1148, 7
        %v1150 = vsub.s32 0, %v1149
        %v1151 = vrot.slane %v1122, %v1150
        %v1152 = vlaneseq
        %v1153 = vshrl.u32 %v1152, 7
        %v1154 = vsub.s32 0, %v1153
        %v1155 = vrot.slane %v1136, %v1154
        %v1156 = vlaneseq
        %v1157 = vshrl.u32 %v1156, 7
        %v1158 = vsub.s32 0, %v1157
        %v1159 = vrot.slane %v1144, %v1158
        %v1160 = vlaneseq
        %v1161 = vshrl.u32 %v1160, 7
        %v1162 = vsub.s32 0, %v1161
        %v1163 = vrot.slane %v1146, %v1162
        %v1164 = vlaneseq
        %v1165 = vshrl.u32 %v1164, 7
        %v1166 = vsub.s32 0, %v1165
        %v1167 = vrot.slane %v1129, %v1166
        %v1168 = vlaneseq
        %v1169 = vshrl.u32 %v1168, 7
        %v1170 = vsub.s32 0, %v1169
        %v1171 = vrot.slane %v1143, %v1170
        %v1172 = vlaneseq
        %v1173 = vshrl.u32 %v1172, 7
        %v1174 = vsub.s32 0, %v1173
        %v1175 = vrot.slane %v1145, %v1174
        %v1176 = vlaneseq
        %v1177 = vshrl.u32 %v1176, 7
        %v1178 = vsub.s32 0, %v1177
        %v1179 = vrot.slane %v1147, %v1178
        %v1188 = vmul.f32 %v1151, %v1091
        %v1189 = vmul.f32 %v1155, %v1092
        %v1190 = vmul.f32 %v1159, %v1093
        %v1191 = vmul.f32 %v1163, %v1094
        %v1192 = vmul.f32 %v1167, %v1095
        %v1193 = vmul.f32 %v1171, %v1096
        %v1194 = vmul.f32 %v1175, %v1097
        %v1195 = vmul.f32 %v1179, %v1098
        %v1196 = vsel %vm1013, %v1188, 0.0
        %1197 = vadd.xlane.f32.xlu0 %v1196
        %v1198 = vpop.xlane.xlu0 %1197
        %v1199 = vsel %vm1013, %v1189, 0.0
        %1200 = vadd.xlane.f32.xlu0 %v1199
        %v1201 = vpop.xlane.xlu0 %1200
        %v1202 = vsel %vm1013, %v1190, 0.0
        %1203 = vadd.xlane.f32.xlu0 %v1202
        %v1204 = vpop.xlane.xlu0 %1203
        %v1205 = vsel %vm1013, %v1191, 0.0
        %1206 = vadd.xlane.f32.xlu0 %v1205
        %v1207 = vpop.xlane.xlu0 %1206
        %v1208 = vsel %vm1013, %v1192, 0.0
        %1209 = vadd.xlane.f32.xlu0 %v1208
        %v1210 = vpop.xlane.xlu0 %1209
        %v1211 = vsel %vm1013, %v1193, 0.0
        %1212 = vadd.xlane.f32.xlu0 %v1211
        %v1213 = vpop.xlane.xlu0 %1212
        %v1214 = vsel %vm1013, %v1194, 0.0
        %1215 = vadd.xlane.f32.xlu0 %v1214
        %v1216 = vpop.xlane.xlu0 %1215
        %v1217 = vsel %vm1013, %v1195, 0.0
        %1218 = vadd.xlane.f32.xlu0 %v1217
        %v1219 = vpop.xlane.xlu0 %1218
        %v1228 = vlaneseq
        %v1229 = vand.u32 %v1228, 127
        %v1230 = vlaneseq
        %v1231 = vshrl.u32 %v1230, 7
        %v1232 = vsub.s32 %v1229, %v1231
        %v1233 = vrot.slane %v1198, %v1232
        %v1234 = vlaneseq
        %v1235 = vshrl.u32 %v1234, 7
        %v1236 = vsub.s32 %v1229, %v1235
        %v1237 = vrot.slane %v1201, %v1236
        %v1238 = vlaneseq
        %v1239 = vshrl.u32 %v1238, 7
        %v1240 = vsub.s32 %v1229, %v1239
        %v1241 = vrot.slane %v1204, %v1240
        %v1242 = vlaneseq
        %v1243 = vshrl.u32 %v1242, 7
        %v1244 = vsub.s32 %v1229, %v1243
        %v1245 = vrot.slane %v1207, %v1244
        %v1246 = vlaneseq
        %v1247 = vshrl.u32 %v1246, 7
        %v1248 = vsub.s32 %v1229, %v1247
        %v1249 = vrot.slane %v1210, %v1248
        %v1250 = vlaneseq
        %v1251 = vshrl.u32 %v1250, 7
        %v1252 = vsub.s32 %v1229, %v1251
        %v1253 = vrot.slane %v1213, %v1252
        %v1254 = vlaneseq
        %v1255 = vshrl.u32 %v1254, 7
        %v1256 = vsub.s32 %v1229, %v1255
        %v1257 = vrot.slane %v1216, %v1256
        %v1258 = vlaneseq
        %v1259 = vshrl.u32 %v1258, 7
        %v1260 = vsub.s32 %v1229, %v1259
        %v1261 = vrot.slane %v1219, %v1260
        %vm1262 = vcmask 1041409
        %v1263 = vsel %vm1262, %v1237, %v1233
        %vm1264 = vcmask 1042434
        %v1265 = vsel %vm1264, %v1241, %v1263
        %vm1266 = vcmask 1043459
        %v1267 = vsel %vm1266, %v1245, %v1265
        %vm1268 = vcmask 1044484
        %v1269 = vsel %vm1268, %v1249, %v1267
        %vm1270 = vcmask 1045509
        %v1271 = vsel %vm1270, %v1253, %v1269
        %vm1272 = vcmask 1046534
        %v1273 = vsel %vm1272, %v1257, %v1271
        %vm1274 = vcmask 1047559
        %v1275 = vsel %vm1274, %v1261, %v1273
        %v1277 = vadd.f32 %v1090, %v1275
        %v1278 = vlaneseq
        %v1279 = vshrl.u32 %v1278, 7
        %vm1280 = vcmp.le.s32.totalorder %v1229, %v1279
        %v1281 = vsel %vm1280, %v1277, -1e+30
        %vm1282 = vcmask 64512
        %v1283 = vsel %vm1282, %v1281, -inf
        %1284 = vmax.xlane.f32.xlu0 %v1283
        %v1285 = vpop.xlane.xlu0 %1284
        %v1286 = vsub.f32 %v1281, %v1285
        %v1287 = vmul.f32 %v1286, 1.442695
        %v1288 = vpow.pop %v1287
        %v1289 = vsel %vm1282, %v1288, 0.0
        %1290 = vadd.xlane.f32.xlu0 %v1289
        %v1291 = vpop.xlane.xlu0 %1290
        %v1292 = vrcp.pop %v1291
        %v1293 = vmul.f32 %v1288, %v1292
        %v1295 = vsel %vm1282, %v1293, 0
        %1297 = vmatprep.subr.mxu0 0.0
        %1298 = vmatpush1.msra.mxu0 %v1010
        %1299 = vmatprep.subr.mxu0 0.0
        %1300 = vmatpush1.msra.mxu0 0.0
        %1301 = vmatprep.subr.mxu0 0.0
        %1302 = vmatpush1.msra.mxu0 0.0
        %1303 = vmatprep.subr.mxu0 0.0
        %1304 = vmatpush1.msra.mxu0 0.0
        %1305 = vmatprep.subr.mxu0 0.0
        %1306 = vmatpush1.msra.mxu0 0.0
        %1307 = vmatprep.subr.mxu0 0.0
        %1308 = vmatpush1.msra.mxu0 0.0
        %1309 = vmatprep.subr.mxu0 0.0
        %1310 = vmatpush1.msra.mxu0 0.0
        %1311 = vmatprep.subr.mxu0 0.0
        %1312 = vmatpush1.msra.mxu0 0.0
        %1313 = vmatprep.subr.mxu0 0.0
        %1314 = vmatpush1.msra.mxu0 0.0
        %1315 = vmatprep.subr.mxu0 0.0
        %1316 = vmatpush1.msra.mxu0 0.0
        %1317 = vmatprep.subr.mxu0 0.0
        %1318 = vmatpush1.msra.mxu0 0.0
        %1319 = vmatprep.subr.mxu0 0.0
        %1320 = vmatpush1.msra.mxu0 0.0
        %1321 = vmatprep.subr.mxu0 0.0
        %1322 = vmatpush1.msra.mxu0 0.0
        %1323 = vmatprep.subr.mxu0 0.0
        %1324 = vmatpush1.msra.mxu0 0.0
        %1325 = vmatprep.subr.mxu0 0.0
        %1326 = vmatpush1.msra.mxu0 0.0
        %1327 = vmatprep.subr.mxu0 0.0
        %1328 = vmatpush1.msra.mxu0 0.0
        %1329 = vmatprep.subr.mxu0 0.0
        %1330 = vmatpush1.msra.mxu0 0.0
        %1331 = vmatprep.subr.mxu0 0.0
        %1332 = vmatpush1.msra.mxu0 0.0
        %1333 = vmatprep.subr.mxu0 0.0
        %1334 = vmatpush1.msra.mxu0 0.0
        %1335 = vmatprep.subr.mxu0 0.0
        %1336 = vmatpush1.msra.mxu0 0.0
        %1337 = vmatprep.subr.mxu0 0.0
        %1338 = vmatpush1.msra.mxu0 0.0
        %1339 = vmatprep.subr.mxu0 0.0
        %1340 = vmatpush1.msra.mxu0 0.0
        %1341 = vmatprep.subr.mxu0 0.0
        %1342 = vmatpush1.msra.mxu0 0.0
        %1343 = vmatprep.subr.mxu0 0.0
        %1344 = vmatpush1.msra.mxu0 0.0
        %1345 = vmatprep.subr.mxu0 0.0
        %1346 = vmatpush1.msra.mxu0 0.0
        %1347 = vmatprep.subr.mxu0 0.0
        %1348 = vmatpush1.msra.mxu0 0.0
        %1349 = vmatprep.subr.mxu0 0.0
        %1350 = vmatpush1.msra.mxu0 0.0
        %1351 = vmatprep.subr.mxu0 0.0
        %1352 = vmatpush1.msra.mxu0 0.0
        %1353 = vmatprep.subr.mxu0 0.0
        %1354 = vmatpush1.msra.mxu0 0.0
        %1355 = vmatprep.subr.mxu0 0.0
        %1356 = vmatpush1.msra.mxu0 0.0
        %1357 = vmatprep.subr.mxu0 0.0
        %1358 = vmatpush1.msra.mxu0 0.0
        %1359 = vmatprep.subr.mxu0 0.0
        %1360 = vmatpush1.msra.mxu0 0.0
        %1361 = vmatprep.mubr.f32.mxu0 0.0
        %1362 = vmatmul.mubr.f32.gmra.mrb[0].mxu0 %v1295
        %v1363 = vpop.f32.mrb[0].mxu0
        %v1364 = vadd.f32 0.0, %v1363
        %v1365 = vpop.f32.mrb[0].mxu0
        %1366 = vdwg.mxu0
        %v1367 = vld [vmem:[#allocation2] sm:$0xff]
        %v1368 = vld [vmem:[#allocation2 + $0x8] sm:$0xff]
        %v1369 = vld [vmem:[#allocation2 + $0x10] sm:$0xff]
        %v1370 = vld [vmem:[#allocation2 + $0x18] sm:$0xff]
        %v1371 = vld [vmem:[%s388] sm:$0xff]
        %v1372 = vld [vmem:[%s388 + $0x8] sm:$0xff]
        %v1373 = vld [vmem:[%s388 + $0x10] sm:$0xff]
        %v1374 = vld [vmem:[%s388 + $0x18] sm:$0xff]
        %v1375 = vld [vmem:[%s388 + $0x20] sm:$0xff]
        %v1376 = vld [vmem:[%s388 + $0x28] sm:$0xff]
        %v1377 = vld [vmem:[%s388 + $0x30] sm:$0xff]
        %v1378 = vld [vmem:[%s388 + $0x38] sm:$0xff]
        %v1379 = vld [vmem:[%s388 + $0x40] sm:$0xff]
        %v1380 = vld [vmem:[%s388 + $0x48] sm:$0xff]
        %v1381 = vld [vmem:[%s388 + $0x50] sm:$0xff]
        %v1382 = vld [vmem:[%s388 + $0x58] sm:$0xff]
        %v1383 = vld [vmem:[%s388 + $0x60] sm:$0xff]
        %v1384 = vld [vmem:[%s388 + $0x68] sm:$0xff]
        %v1385 = vld [vmem:[%s388 + $0x70] sm:$0xff]
        %v1386 = vld [vmem:[%s388 + $0x78] sm:$0xff]
        %v1387 = vld [vmem:[%s388 + $0x80] sm:$0xff]
        %v1388 = vld [vmem:[%s388 + $0x88] sm:$0xff]
        %v1389 = vld [vmem:[%s388 + $0x90] sm:$0xff]
        %v1390 = vld [vmem:[%s388 + $0x98] sm:$0xff]
        %v1391 = vld [vmem:[%s388 + $0xa0] sm:$0xff]
        %v1392 = vld [vmem:[%s388 + $0xa8] sm:$0xff]
        %v1393 = vld [vmem:[%s388 + $0xb0] sm:$0xff]
        %v1394 = vld [vmem:[%s388 + $0xb8] sm:$0xff]
        %v1395 = vld [vmem:[%s388 + $0xc0] sm:$0xff]
        %v1396 = vld [vmem:[%s388 + $0xc8] sm:$0xff]
        %v1397 = vld [vmem:[%s388 + $0xd0] sm:$0xff]
        %v1398 = vld [vmem:[%s388 + $0xd8] sm:$0xff]
        %v1399 = vld [vmem:[%s388 + $0xe0] sm:$0xff]
        %v1400 = vld [vmem:[%s388 + $0xe8] sm:$0xff]
        %v1401 = vld [vmem:[%s388 + $0xf0] sm:$0xff]
        %v1402 = vld [vmem:[%s388 + $0xf8] sm:$0xff]
        %v1404 = vsel %vm1013, %v1364, 0
        %1406 = vmatprep.subr.mxu0 %v1372
        %1407 = vmatpush1.msra.mxu0 %v1371
        %1408 = vmatprep.subr.mxu0 %v1376
        %1409 = vmatpush1.msra.mxu0 %v1375
        %1410 = vmatprep.subr.mxu0 %v1380
        %1411 = vmatpush1.msra.mxu0 %v1379
        %1412 = vmatprep.subr.mxu0 %v1384
        %1413 = vmatpush1.msra.mxu0 %v1383
        %1414 = vmatprep.subr.mxu0 %v1388
        %1415 = vmatpush1.msra.mxu0 %v1387
        %1416 = vmatprep.subr.mxu0 %v1392
        %1417 = vmatpush1.msra.mxu0 %v1391
        %1418 = vmatprep.subr.mxu0 %v1396
        %1419 = vmatpush1.msra.mxu0 %v1395
        %1420 = vmatprep.subr.mxu0 %v1400
        %1421 = vmatpush1.msra.mxu0 %v1399
        %1422 = vmatprep.subr.mxu0 0.0
        %1423 = vmatpush1.msra.mxu0 0.0
        %1424 = vmatprep.subr.mxu0 0.0
        %1425 = vmatpush1.msra.mxu0 0.0
        %1426 = vmatprep.subr.mxu0 0.0
        %1427 = vmatpush1.msra.mxu0 0.0
        %1428 = vmatprep.subr.mxu0 0.0
        %1429 = vmatpush1.msra.mxu0 0.0
        %1430 = vmatprep.subr.mxu0 0.0
        %1431 = vmatpush1.msra.mxu0 0.0
        %1432 = vmatprep.subr.mxu0 0.0
        %1433 = vmatpush1.msra.mxu0 0.0
        %1434 = vmatprep.subr.mxu0 0.0
        %1435 = vmatpush1.msra.mxu0 0.0
        %1436 = vmatprep.subr.mxu0 0.0
        %1437 = vmatpush1.msra.mxu0 0.0
        %1438 = vmatprep.subr.mxu0 0.0
        %1439 = vmatpush1.msra.mxu0 0.0
        %1440 = vmatprep.subr.mxu0 0.0
        %1441 = vmatpush1.msra.mxu0 0.0
        %1442 = vmatprep.subr.mxu0 0.0
        %1443 = vmatpush1.msra.mxu0 0.0
        %1444 = vmatprep.subr.mxu0 0.0
        %1445 = vmatpush1.msra.mxu0 0.0
        %1446 = vmatprep.subr.mxu0 0.0
        %1447 = vmatpush1.msra.mxu0 0.0
        %1448 = vmatprep.subr.mxu0 0.0
        %1449 = vmatpush1.msra.mxu0 0.0
        %1450 = vmatprep.subr.mxu0 0.0
        %1451 = vmatpush1.msra.mxu0 0.0
        %1452 = vmatprep.subr.mxu0 0.0
        %1453 = vmatpush1.msra.mxu0 0.0
        %1454 = vmatprep.subr.mxu0 0.0
        %1455 = vmatpush1.msra.mxu0 0.0
        %1456 = vmatprep.subr.mxu0 0.0
        %1457 = vmatpush1.msra.mxu0 0.0
        %1458 = vmatprep.subr.mxu0 0.0
        %1459 = vmatpush1.msra.mxu0 0.0
        %1460 = vmatprep.subr.mxu0 0.0
        %1461 = vmatpush1.msra.mxu0 0.0
        %1462 = vmatprep.subr.mxu0 0.0
        %1463 = vmatpush1.msra.mxu0 0.0
        %1464 = vmatprep.subr.mxu0 0.0
        %1465 = vmatpush1.msra.mxu0 0.0
        %1466 = vmatprep.subr.mxu0 0.0
        %1467 = vmatpush1.msra.mxu0 0.0
        %1468 = vmatprep.subr.mxu0 0.0
        %1469 = vmatpush1.msra.mxu0 0.0
        %1470 = vmatprep.mubr.f32.mxu0 0.0
        %1471 = vmatmul.mubr.f32.gmra.mrb[0].mxu0 %v1404
        %v1472 = vpop.f32.mrb[0].mxu0
        %v1473 = vadd.f32 0.0, %v1472
        %v1474 = vpop.f32.mrb[0].mxu0
        %v1475 = vadd.f32 0.0, %v1474
        %1476 = vdwg.mxu0
        %1477 = vmatprep.subr.mxu0 %v1374
        %1478 = vmatpush1.msra.mxu0 %v1373
        %1479 = vmatprep.subr.mxu0 %v1378
        %1480 = vmatpush1.msra.mxu0 %v1377
        %1481 = vmatprep.subr.mxu0 %v1382
        %1482 = vmatpush1.msra.mxu0 %v1381
        %1483 = vmatprep.subr.mxu0 %v1386
        %1484 = vmatpush1.msra.mxu0 %v1385
        %1485 = vmatprep.subr.mxu0 %v1390
        %1486 = vmatpush1.msra.mxu0 %v1389
        %1487 = vmatprep.subr.mxu0 %v1394
        %1488 = vmatpush1.msra.mxu0 %v1393
        %1489 = vmatprep.subr.mxu0 %v1398
        %1490 = vmatpush1.msra.mxu0 %v1397
        %1491 = vmatprep.subr.mxu0 %v1402
        %1492 = vmatpush1.msra.mxu0 %v1401
        %1493 = vmatprep.subr.mxu0 0.0
        %1494 = vmatpush1.msra.mxu0 0.0
        %1495 = vmatprep.subr.mxu0 0.0
        %1496 = vmatpush1.msra.mxu0 0.0
        %1497 = vmatprep.subr.mxu0 0.0
        %1498 = vmatpush1.msra.mxu0 0.0
        %1499 = vmatprep.subr.mxu0 0.0
        %1500 = vmatpush1.msra.mxu0 0.0
        %1501 = vmatprep.subr.mxu0 0.0
        %1502 = vmatpush1.msra.mxu0 0.0
        %1503 = vmatprep.subr.mxu0 0.0
        %1504 = vmatpush1.msra.mxu0 0.0
        %1505 = vmatprep.subr.mxu0 0.0
        %1506 = vmatpush1.msra.mxu0 0.0
        %1507 = vmatprep.subr.mxu0 0.0
        %1508 = vmatpush1.msra.mxu0 0.0
        %1509 = vmatprep.subr.mxu0 0.0
        %1510 = vmatpush1.msra.mxu0 0.0
        %1511 = vmatprep.subr.mxu0 0.0
        %1512 = vmatpush1.msra.mxu0 0.0
        %1513 = vmatprep.subr.mxu0 0.0
        %1514 = vmatpush1.msra.mxu0 0.0
        %1515 = vmatprep.subr.mxu0 0.0
        %1516 = vmatpush1.msra.mxu0 0.0
        %1517 = vmatprep.subr.mxu0 0.0
        %1518 = vmatpush1.msra.mxu0 0.0
        %1519 = vmatprep.subr.mxu0 0.0
        %1520 = vmatpush1.msra.mxu0 0.0
        %1521 = vmatprep.subr.mxu0 0.0
        %1522 = vmatpush1.msra.mxu0 0.0
        %1523 = vmatprep.subr.mxu0 0.0
        %1524 = vmatpush1.msra.mxu0 0.0
        %1525 = vmatprep.subr.mxu0 0.0
        %1526 = vmatpush1.msra.mxu0 0.0
        %1527 = vmatprep.subr.mxu0 0.0
        %1528 = vmatpush1.msra.mxu0 0.0
        %1529 = vmatprep.subr.mxu0 0.0
        %1530 = vmatpush1.msra.mxu0 0.0
        %1531 = vmatprep.subr.mxu0 0.0
        %1532 = vmatpush1.msra.mxu0 0.0
        %1533 = vmatprep.subr.mxu0 0.0
        %1534 = vmatpush1.msra.mxu0 0.0
        %1535 = vmatprep.subr.mxu0 0.0
        %1536 = vmatpush1.msra.mxu0 0.0
        %1537 = vmatprep.subr.mxu0 0.0
        %1538 = vmatpush1.msra.mxu0 0.0
        %1539 = vmatprep.subr.mxu0 0.0
        %1540 = vmatpush1.msra.mxu0 0.0
        %1541 = vmatprep.mubr.f32.mxu0 0.0
        %1542 = vmatmul.mubr.f32.gmra.mrb[0].mxu0 %v1404
        %v1543 = vpop.f32.mrb[0].mxu0
        %v1544 = vadd.f32 0.0, %v1543
        %v1545 = vpop.f32.mrb[0].mxu0
        %v1546 = vadd.f32 0.0, %v1545
        %1547 = vdwg.mxu0
        %v1548 = vadd.f32 %v1367, %v1473
        %v1549 = vadd.f32 %v1368, %v1475
        %v1550 = vadd.f32 %v1369, %v1544
        %v1551 = vadd.f32 %v1370, %v1546
        %1552 = vst [vmem:[#allocation2] sm:$0xff] %v1548
        %1553 = vst [vmem:[#allocation2 + $0x8] sm:$0xff] %v1549
        %1554 = vst [vmem:[#allocation2 + $0x10] sm:$0xff] %v1550
        %1555 = vst [vmem:[#allocation2 + $0x18] sm:$0xff] %v1551
        %p1556 = scmp.eq.s32.totalorder %s26, 7
        // Predicated region
        $region53: #{tpu_custom_call.1} parent=47 // pred_check
          %p1557 = pneg %p1556
        $region54: #{tpu_custom_call.1} parent=47 // pred_check_branch
          %1559 = sbr.rel (%p1557) target = $region56
        $region55: #{tpu_custom_call.1} parent=47 // pred_region
          %v1560 = vld [vmem:[#allocation2] sm:$0xff]
          %v1561 = vld [vmem:[#allocation2 + $0x8] sm:$0xff]
          %v1562 = vld [vmem:[#allocation2 + $0x10] sm:$0xff]
          %v1563 = vld [vmem:[#allocation2 + $0x18] sm:$0xff]
          %v1564 = vld [vmem:[%s6] sm:$0xf]
          %v1566 = vlaneseq
          %v1567 = vshrl.u32 %v1566, 7
          %v1568 = vsub.s32 0, %v1567
          %v1569 = vrot.slane %v1564, %v1568
          %v1570 = vlaneseq
          %v1571 = vshrl.u32 %v1570, 7
          %v1572 = vsub.s32 1, %v1571
          %v1573 = vrot.slane %v1564, %v1572
          %v1574 = vlaneseq
          %v1575 = vshrl.u32 %v1574, 7
          %v1576 = vsub.s32 2, %v1575
          %v1577 = vrot.slane %v1564, %v1576
          %v1578 = vlaneseq
          %v1579 = vshrl.u32 %v1578, 7
          %v1580 = vsub.s32 3, %v1579
          %v1581 = vrot.slane %v1564, %v1580
          %v1586 = vadd.f32 %v1560, %v1569
          %v1587 = vadd.f32 %v1561, %v1573
          %v1588 = vadd.f32 %v1562, %v1577
          %v1589 = vadd.f32 %v1563, %v1581
          %1590 = vst [vmem:[%s358] sm:$0xff] %v1586
          %1591 = vst [vmem:[%s358 + $0x8] sm:$0xff] %v1587
          %1592 = vst [vmem:[%s358 + $0x10] sm:$0xff] %v1588
          %1593 = vst [vmem:[%s358 + $0x18] sm:$0xff] %v1589
        $region56: #{tpu_custom_call.1} parent=47 // pred_fallthru
          _
        %s1594 = sand.u32 %s218, 1
        %s1595 = scalar_lea.sflag [#allocation4], %s1594
        %s1596 = sand.u32 %s218, 1
        %s1597 = smul.addr %s1596, 32
        %s1598 = scalar_lea.vmem [#allocation3], %s1597
        // Predicated region
        $region57: #{tpu_custom_call.1} parent=47 // pred_check
          %p1599 = pneg %p228
        $region58: #{tpu_custom_call.1} parent=47 // pred_check_branch
          %1601 = sbr.rel (%p1599) target = $region60
        $region59: #{tpu_custom_call.1} parent=47 // pred_region
          %s1603 = ssub.s32 512, 512
          %1604 = vsyncadd %s1595, %s1603
          %s1605 = smul.addr %s25, 4
          %s1606 = smul.addr %s1605, 128
          %s1607 = scalar_lea.hbm %s7, %s1606
          %s1609 = sshll.u32 %s1598, 4
          %s1610 = int_to_ptr.vmem [resolvable:$true] %s1609
          %1612 = dma.vmem_to_hbm [thread:$0]  %s1610, 512, %s1607, %s1595
        $region60: #{tpu_custom_call.1} parent=47 // pred_fallthru
          _
      $region48: #{tpu_custom_call.1} parent=5 // pred_fallthru
        _
      %p1613 = scmp.le.s32.totalorder 2, %s16
      // Predicated region
      $region61: #{tpu_custom_call.1} parent=5 // pred_check
        %p1614 = pneg %p1613
      $region62: #{tpu_custom_call.1} parent=5 // pred_check_branch
        %1616 = sbr.rel (%p1614) target = $region64
      $region63: #{tpu_custom_call.1} parent=5 // pred_region
        %s1617 = ssub.s32 %s16, 2
        // Predicated region
        $region65: #{tpu_custom_call.1} parent=63 // pred_check
          %p1618 = pneg %p234
        $region66: #{tpu_custom_call.1} parent=63 // pred_check_branch
          %1620 = sbr.rel (%p1618) target = $region68
        $region67: #{tpu_custom_call.1} parent=63 // pred_region
          %s1621 = sand.u32 %s219, 1
          %s1622 = scalar_lea.sflag [#allocation4], %s1621
          %s1623 = sand.u32 %s219, 1
          %s1624 = smul.addr %s1623, 32
          %s1625 = scalar_lea.vmem [#allocation3], %s1624
          %1626 = dma.done %s1622, 512
        $region68: #{tpu_custom_call.1} parent=63 // pred_fallthru
          _
      $region64: #{tpu_custom_call.1} parent=5 // pred_fallthru
        _
    $region6: #{tpu_custom_call.1} parent=1 // loop_footer
      %s20 = sadd.s32 1, %s16
    $region7: #{tpu_custom_call.1} parent=1 // loop_footer_branch
      %15 = sbr.rel target = $region3
    $region8: #{tpu_custom_call.1} parent=1 // loop_exit
      _
    %1627 = vsyncpa [#allocation4], 1
    %s1628 = scalar_lea.sflag [#allocation4], 1
    %1629 = vsyncpa %s1628, 1

</llo_original>
